<compile_context>
chip_gen: v6e
topology: v6e:2x2x1
jax: 0.10.0
libtpu: 0.0.40
codegen_flags: <defaults>
</compile_context>

<pallas_src>
import math

import jax
import jax.numpy as jnp
from jax import lax
from jax.experimental import pallas as pl
from jax.experimental.pallas import tpu as pltpu


# ---------------------------------------------------------------------------
# helpers
# ---------------------------------------------------------------------------
def _round_up(x, m):
    return -(-x // m) * m


def _padded_block_bytes(shape, itemsize=4):
    """VMEM footprint of a block after (8, 128) minor-dim layout padding."""
    s = list(shape)
    if len(s) >= 1:
        s[-1] = _round_up(s[-1], 128)
    if len(s) >= 2:
        s[-2] = _round_up(s[-2], 8)
    n = 1
    for d in s:
        n *= d
    return n * itemsize


# ---------------------------------------------------------------------------
# Pallas kernel: one batch tile per grid step.
#   xv_ref : (bt, Cv, T, HW)     original layout, lane = HW
#   xa_ref : (bt, Ca, T, KT*F)   original (time-padded) layout, lane = KT*F
#   w_ref  : (Cmax, COLS)        packed weights + biases (BN folded, eval mode)
#   out_ref: (bt, Ca, T)
# ---------------------------------------------------------------------------
def _make_kernel(Cv, Ca, Cvr, Car, KT, F, offs):
    o_ap, o_g, o_va, o_aa, o_bv, o_ba, o_b = offs

    def kernel(xv_ref, xa_ref, w_ref, out_ref):
        f32 = jnp.float32
        bt = xv_ref.shape[0]
        T = out_ref.shape[2]

        # ---- unpack the single parameter slab (static slices) -------------
        w = w_ref[...]
        wap = w[:Ca, o_ap:o_ap + KT * Ca]          # audio_proj, taps stacked on K
        wg = w[:Cv, o_g:o_g + Cv]                  # g (1x1x1 conv)
        wva = w[:Cvr, o_va:o_va + Cv]              # visual_a (BN folded)
        waa = w[:Car, o_aa:o_aa + Ca]              # audio_a  (BN folded)
        wbv = w[:Ca, o_bv:o_bv + Cvr]              # b, visual half
        wba = w[:Ca, o_ba:o_ba + Car]              # b, audio half
        b_ap = w[:Ca, o_b + 0:o_b + 1]
        b_g = w[:Cv, o_b + 1:o_b + 2]
        b_va = w[:Cvr, o_b + 2:o_b + 3]
        b_aa = w[:Car, o_b + 3:o_b + 4]

        def bmm(wm, x):
            # (o, c) x (bt, c, t) -> (bt, o, t): batched MXU matmul, weight
            # broadcast over the (small) batch tile.
            wb = jnp.broadcast_to(wm, (bt,) + wm.shape)
            return lax.dot_general(wb, x, (((2,), (1,)), ((0,), (0,))),
                                   preferred_element_type=f32)

        # ---- visual branch: spatial mean (lane reduce) + global-mean path --
        xv = xv_ref[...].astype(f32)                               # (bt,Cv,T,HW)
        xv_pool = jnp.mean(xv, axis=-1)                            # (bt,Cv,T)
        glob = jnp.mean(xv_pool, axis=-1, keepdims=True)           # (bt,Cv,1)
        g_out = bmm(wg, jnp.broadcast_to(glob, xv_pool.shape)) + b_g
        v = bmm(wva, xv_pool + g_out) + b_va                       # BN folded
        v = jnp.maximum(v, 0.0)

        # ---- audio branch: per-tap freq mean (lane reduce) then conv taps --
        xa = xa_ref[...].astype(f32)                               # (bt,Ca,T,KT*F)
        a_pool = jnp.broadcast_to(b_ap, (bt, Ca, T))
        for j in range(KT):                                        # KT is small, static
            mean_j = jnp.mean(xa[..., j * F:(j + 1) * F], axis=-1)  # (bt,Ca,T)
            a_pool = a_pool + bmm(wap[:, j * Ca:(j + 1) * Ca], mean_j)
        a = bmm(waa, a_pool) + b_aa                                # BN folded
        a = jnp.maximum(a, 0.0)

        # ---- fuse: cat -> relu -> b(...) + 1 --------------------------------
        out = bmm(wbv, v) + bmm(wba, a) + 1.0                      # (bt,Ca,T)
        out_ref[...] = out.astype(out_ref.dtype)

    return kernel


# ---------------------------------------------------------------------------
# Wrapper: parameter folding/packing, reshape-only views, tiling + pallas_call.
# ---------------------------------------------------------------------------
def av2a_routefunc_forward(xv, xa, params, video_length):
    B, Cv, T, H, W = xv.shape
    _, Ca, Ta, F = xa.shape
    assert T == video_length
    HW = H * W
    KT = math.ceil(Ta / T)
    pad_t = KT * T - Ta

    (wap, bap, wg, bg, wva, bva, bns_v, bnt_v,
     waa, baa, bns_a, bnt_a, wbv, wba) = params
    Cvr, Car = wva.shape[0], waa.shape[0]
    assert wap.shape[0] == KT

    # ---- fold eval-mode BN into the convs; pack all params into ONE slab ----
    wva_f = wva * bns_v
    bva_f = bva * bns_v + bnt_v
    waa_f = waa * bns_a
    baa_f = baa * bns_a + bnt_a
    wap_s = jnp.transpose(wap, (1, 0, 2)).reshape(Ca, KT * Ca)     # [o, j*Ca+c]

    Cmax = max(Cv, Ca, Cvr, Car)
    pieces = [wap_s, wg, wva_f, waa_f, wbv, wba, bap, bg, bva_f, baa_f]
    offs, cols, off = [], [], 0
    for p in pieces:
        offs.append(off)
        off += p.shape[1]
        cols.append(jnp.pad(p.astype(jnp.float32),
                            ((0, Cmax - p.shape[0]), (0, 0))))
    wpack = jnp.concatenate(cols, axis=1)                          # (Cmax, off)
    k_offs = tuple(offs[:7])            # 6 weight offsets + start of bias cols

    # ---- reshape-only (no-copy) views of the original tensors ---------------
    xv_r = xv.reshape(B, Cv, T, HW)
    xa_p = jnp.pad(xa, ((0, 0), (0, 0), (0, pad_t), (0, 0))) if pad_t else xa
    xa_r = xa_p.reshape(B, Ca, T, KT * F)       # time index tau = t*KT + j

    # ---- generation-aware batch tiling & VMEM budget -------------------------
    try:
        vmem_cap = int(pltpu.get_tpu_info().vmem_capacity_bytes)
    except Exception:
        vmem_cap = 64 << 20                     # conservative (v7x) fallback
    per_batch = (_padded_block_bytes((1, Cv, T, HW))
                 + _padded_block_bytes((1, Ca, T, KT * F)))
    budget = max(2 << 20, int(vmem_cap * 0.15))
    # keep >= 2 grid steps when B >= 2 (megacore), cap the batch tile so the
    # unrolled batched matmuls stay small, and pick a divisor of B (no padding).
    max_bt = max(1, min(B // 2 if B >= 2 else 1,
                        budget // max(per_batch, 1), 8))
    b_tile = 1
    for d in range(1, max_bt + 1):
        if B % d == 0:
            b_tile = d
    nb = B // b_tile

    blk_bytes = (_padded_block_bytes((b_tile, Cv, T, HW))
                 + _padded_block_bytes((b_tile, Ca, T, KT * F))
                 + _padded_block_bytes((b_tile, Ca, T))
                 + _padded_block_bytes(wpack.shape))
    vmem_limit = int(min(int(vmem_cap * 0.75),
                         max(2 * blk_bytes + (2 << 20), 16 << 20)))

    kernel = _make_kernel(Cv, Ca, Cvr, Car, KT, F, k_offs)

    flops = int(2 * B * T * (Cv * Cv + Cvr * Cv + KT * Ca * Ca + Car * Ca
                             + Ca * (Cvr + Car))
                + B * Cv * T * HW + B * Ca * T * KT * F)
    bytes_accessed = int(4 * (xv_r.size + xa_r.size + wpack.size + B * Ca * T))

    out3 = pl.pallas_call(
        kernel,
        out_shape=jax.ShapeDtypeStruct((B, Ca, T), jnp.float32),
        grid=(nb,),
        in_specs=[
            pl.BlockSpec((b_tile, Cv, T, HW), lambda i: (i, 0, 0, 0)),
            pl.BlockSpec((b_tile, Ca, T, KT * F), lambda i: (i, 0, 0, 0)),
            pl.BlockSpec(wpack.shape, lambda i: (0, 0)),
        ],
        out_specs=pl.BlockSpec((b_tile, Ca, T), lambda i: (i, 0, 0)),
        compiler_params=pltpu.CompilerParams(
            dimension_semantics=("parallel",),
            vmem_limit_bytes=vmem_limit),
        cost_estimate=pl.CostEstimate(flops=flops, transcendentals=0,
                                      bytes_accessed=bytes_accessed),
    )(xv_r, xa_r, wpack)

    return out3[..., None, None]                 # (B, Ca, T, 1, 1)


# ---------------------------------------------------------------------------
# Pure-JAX reference (mirrors the PyTorch forward, eval-mode BN).
# ---------------------------------------------------------------------------
def _reference_forward(xv, xa, params, video_length):
    (wap, bap, wg, bg, wva, bva, bns_v, bnt_v,
     waa, baa, bns_a, bnt_a, wbv, wba) = params
    B, Cv, T, H, W = xv.shape
    _, Ca, Ta, F = xa.shape
    KT = wap.shape[0]
    pad_t = KT * T - Ta

    # audio: pad -> strided conv -> freq mean
    xa_p = jnp.pad(xa, ((0, 0), (0, 0), (0, pad_t), (0, 0)))
    xa_r = xa_p.reshape(B, Ca, T, KT, F)
    conv = jnp.einsum('bctjf,joc->botf', xa_r, wap) + bap.reshape(1, Ca, 1, 1)
    a_pool = conv.mean(-1)                                        # (B, Ca, T)

    # visual: spatial mean, + g(global mean)
    xv_pool = xv.mean(axis=(3, 4))                                # (B, Cv, T)
    xv_glob = xv_pool.mean(axis=2, keepdims=True)                 # (B, Cv, 1)
    g_out = jnp.einsum('oc,bcz->boz', wg, xv_glob) + bg.reshape(1, Cv, 1)
    xv_feat = xv_pool + g_out

    v = jnp.einsum('rc,bct->brt', wva, xv_feat) + bva.reshape(1, -1, 1)
    v = v * bns_v.reshape(1, -1, 1) + bnt_v.reshape(1, -1, 1)
    a = jnp.einsum('rc,bct->brt', waa, a_pool) + baa.reshape(1, -1, 1)
    a = a * bns_a.reshape(1, -1, 1) + bnt_a.reshape(1, -1, 1)
    v = jnp.maximum(v, 0.0)
    a = jnp.maximum(a, 0.0)
    out = (jnp.einsum('or,brt->bot', wbv, v)
           + jnp.einsum('or,brt->bot', wba, a) + 1.0)
    return out[..., None, None]


# ---------------------------------------------------------------------------
# Deterministic parameter construction (shapes follow the module __init__).
# ---------------------------------------------------------------------------
def init_params(key, visual_c_in, audio_c_in, ratio, video_length, audio_length,
                bn_eps=1e-5):
    Cv, Ca = visual_c_in, audio_c_in
    Cvr, Car = Cv // ratio, Ca // ratio
    kt = math.ceil(audio_length / video_length)

    ks = jax.random.split(key, 16)
    n = lambda k, shp, s=0.1: (s * jax.random.normal(k, shp)).astype(jnp.float32)

    # audio_proj: Conv2d(Ca->Ca, kernel=[kt,1], stride=[kt,1]) -> per-tap (Ca,Ca)
    wap = n(ks[0], (kt, Ca, Ca))
    bap = n(ks[1], (Ca, 1))
    # g: Conv3d(Cv->Cv, 1x1x1)
    wg = n(ks[2], (Cv, Cv))
    bg = n(ks[3], (Cv, 1))
    # visual_a / audio_a: Conv3d with kernel [1,1,1]
    wva = n(ks[4], (Cvr, Cv))
    bva = n(ks[5], (Cvr, 1))
    waa = n(ks[6], (Car, Ca))
    baa = n(ks[7], (Car, 1))
    # eval-mode BatchNorm3d, folded into affine scale/shift.
    gam_v = 1.0 + n(ks[8], (Cvr, 1))
    bet_v = n(ks[9], (Cvr, 1))
    mu_v = n(ks[10], (Cvr, 1))
    var_v = 1.0 + 0.1 * jnp.abs(jax.random.normal(ks[11], (Cvr, 1))).astype(jnp.float32)
    bns_v = gam_v / jnp.sqrt(var_v + bn_eps)
    bnt_v = bet_v - mu_v * bns_v

    gam_a = 1.0 + n(ks[12], (Car, 1))
    bet_a = n(ks[13], (Car, 1))
    mu_a = n(ks[14], (Car, 1))
    var_a = 1.0 + 0.1 * jnp.abs(jax.random.normal(ks[15], (Car, 1))).astype(jnp.float32)
    bns_a = gam_a / jnp.sqrt(var_a + bn_eps)
    bnt_a = bet_a - mu_a * bns_a

    # b: Conv3d(Cvr+Car -> Ca, [1,1,1], bias=False), split into channel halves.
    # NOTE: PyTorch __init__ zero-inits b.weight (output would be all 1s); use
    # small non-zero values so the kernel path is exercised.
    kb = jax.random.split(ks[0], 2)
    wbv = n(kb[0], (Ca, Cvr), 0.05)
    wba = n(kb[1], (Ca, Car), 0.05)

    return (wap, bap, wg, bg, wva, bva, bns_v, bnt_v,
            waa, baa, bns_a, bnt_a, wbv, wba)


if __name__ == "__main__":
    # Small shapes consistent with the module.
    B = 2
    visual_c_in = 8
    audio_c_in = 8
    ratio = 2
    video_length = 4          # T
    audio_length = 14         # Ta (-> kt = ceil(14/4) = 4, pad = 2)
    H = W = 8
    F = 16                    # audio freq bins

    key = jax.random.PRNGKey(0)
    kx, ka, kp = jax.random.split(key, 3)
    xv = jax.random.normal(kx, (B, visual_c_in, video_length, H, W), jnp.float32)
    xa = jax.random.normal(ka, (B, audio_c_in, audio_length, F), jnp.float32)

    params = init_params(kp, visual_c_in, audio_c_in, ratio,
                         video_length, audio_length)

    out = av2a_routefunc_forward(xv, xa, params, video_length)
    out = jax.block_until_ready(out)
    assert out.shape == (B, audio_c_in, video_length, 1, 1), out.shape
    assert bool(jnp.all(jnp.isfinite(out)))

    ref = _reference_forward(xv, xa, params, video_length)
    assert jnp.allclose(out, ref, rtol=1e-3, atol=1e-3), \
        float(jnp.max(jnp.abs(out - ref)))
    print("KERNEL_OK")
</pallas_src>

<mosaic_0001>
module attributes {stable_mosaic.version = 11 : i64} {
  func.func @kernel(%arg0: i32, %arg1: memref<1x8x4x64xf32, #tpu.memory_space<vmem>>, %arg2: memref<1x8x4x64xf32, #tpu.memory_space<vmem>>, %arg3: memref<8x68xf32, #tpu.memory_space<vmem>>, %arg4: memref<1x8x4xf32, #tpu.memory_space<vmem>>) attributes {dimension_semantics = [#tpu.dimension_semantics<parallel>], iteration_bounds = array<i64: 2>, scalar_prefetch = 0 : i64, scratch_operands = 0 : i64, tpu.core_type = #tpu.core_type<tc>, window_params = [{transform_indices = @transform_0, window_bounds = array<i64: 1, 8, 4, 64>}, {transform_indices = @transform_1, window_bounds = array<i64: 1, 8, 4, 64>}, {pipeline_mode = #tpu.pipeline_mode<synchronous>, transform_indices = @transform_2, window_bounds = array<i64: 8, 68>}, {transform_indices = @transform_3, window_bounds = array<i64: 1, 8, 4>}]} {
    %c0 = arith.constant 0 : index
    %c0_0 = arith.constant 0 : index
    %0 = vector.load %arg3[%c0, %c0_0] : memref<8x68xf32, #tpu.memory_space<vmem>>, vector<8x68xf32>
    %1 = vector.extract_strided_slice %0 {offsets = [0, 0], sizes = [8, 32], strides = [1, 1]} : vector<8x68xf32> to vector<8x32xf32>
    %2 = vector.extract_strided_slice %0 {offsets = [0, 32], sizes = [8, 8], strides = [1, 1]} : vector<8x68xf32> to vector<8x8xf32>
    %3 = vector.extract_strided_slice %0 {offsets = [0, 40], sizes = [4, 8], strides = [1, 1]} : vector<8x68xf32> to vector<4x8xf32>
    %4 = vector.extract_strided_slice %0 {offsets = [0, 48], sizes = [4, 8], strides = [1, 1]} : vector<8x68xf32> to vector<4x8xf32>
    %5 = vector.extract_strided_slice %0 {offsets = [0, 56], sizes = [8, 4], strides = [1, 1]} : vector<8x68xf32> to vector<8x4xf32>
    %6 = vector.extract_strided_slice %0 {offsets = [0, 60], sizes = [8, 4], strides = [1, 1]} : vector<8x68xf32> to vector<8x4xf32>
    %7 = vector.extract_strided_slice %0 {offsets = [0, 64], sizes = [8, 1], strides = [1, 1]} : vector<8x68xf32> to vector<8x1xf32>
    %8 = vector.extract_strided_slice %0 {offsets = [0, 65], sizes = [8, 1], strides = [1, 1]} : vector<8x68xf32> to vector<8x1xf32>
    %9 = vector.extract_strided_slice %0 {offsets = [0, 66], sizes = [4, 1], strides = [1, 1]} : vector<8x68xf32> to vector<4x1xf32>
    %10 = vector.extract_strided_slice %0 {offsets = [0, 67], sizes = [4, 1], strides = [1, 1]} : vector<8x68xf32> to vector<4x1xf32>
    %c0_1 = arith.constant 0 : index
    %c0_2 = arith.constant 0 : index
    %c0_3 = arith.constant 0 : index
    %c0_4 = arith.constant 0 : index
    %11 = vector.load %arg1[%c0_1, %c0_2, %c0_3, %c0_4] : memref<1x8x4x64xf32, #tpu.memory_space<vmem>>, vector<1x8x4x64xf32>
    %cst = arith.constant dense<0.000000e+00> : vector<1x8x4xf32>
    %12 = vector.multi_reduction <add>, %11, %cst [3] : vector<1x8x4x64xf32> to vector<1x8x4xf32>
    %cst_5 = arith.constant 6.400000e+01 : f32
    %13 = vector.broadcast %cst_5 : f32 to vector<1x8x4xf32>
    %14 = arith.divf %12, %13 : vector<1x8x4xf32>
    %cst_6 = arith.constant dense<0.000000e+00> : vector<1x8xf32>
    %15 = vector.multi_reduction <add>, %14, %cst_6 [2] : vector<1x8x4xf32> to vector<1x8xf32>
    %16 = vector.shape_cast %15 : vector<1x8xf32> to vector<1x8x1xf32>
    %cst_7 = arith.constant 4.000000e+00 : f32
    %17 = vector.broadcast %cst_7 : f32 to vector<1x8x1xf32>
    %18 = arith.divf %16, %17 : vector<1x8x1xf32>
    %19 = vector.shape_cast %18 : vector<1x8x1xf32> to vector<1x8x1xf32>
    %20 = vector.broadcast %19 : vector<1x8x1xf32> to vector<1x8x4xf32>
    %21 = vector.shape_cast %2 : vector<8x8xf32> to vector<1x8x8xf32>
    %cst_8 = arith.constant dense<0.000000e+00> : vector<1x8x4xf32>
    %22 = tpu.matmul %21, %20, %cst_8 {dimension_numbers = #tpu.dot_dimension_numbers<[2], [1], [1], [2], [0, 0, 0, 1, 1, 2], [0], [0]>} : vector<1x8x8xf32>, vector<1x8x4xf32>, vector<1x8x4xf32> -> vector<1x8x4xf32>
    %23 = vector.shape_cast %8 : vector<8x1xf32> to vector<1x8x1xf32>
    %24 = vector.broadcast %23 : vector<1x8x1xf32> to vector<1x8x4xf32>
    %25 = arith.addf %22, %24 : vector<1x8x4xf32>
    %26 = arith.addf %14, %25 : vector<1x8x4xf32>
    %27 = vector.shape_cast %3 : vector<4x8xf32> to vector<1x4x8xf32>
    %cst_9 = arith.constant dense<0.000000e+00> : vector<1x4x4xf32>
    %28 = tpu.matmul %27, %26, %cst_9 {dimension_numbers = #tpu.dot_dimension_numbers<[2], [1], [1], [2], [0, 0, 0, 1, 1, 2], [0], [0]>} : vector<1x4x8xf32>, vector<1x8x4xf32>, vector<1x4x4xf32> -> vector<1x4x4xf32>
    %29 = vector.shape_cast %9 : vector<4x1xf32> to vector<1x4x1xf32>
    %30 = vector.broadcast %29 : vector<1x4x1xf32> to vector<1x4x4xf32>
    %31 = arith.addf %28, %30 : vector<1x4x4xf32>
    %cst_10 = arith.constant 0.000000e+00 : f32
    %32 = vector.broadcast %cst_10 : f32 to vector<1x4x4xf32>
    %33 = arith.maximumf %31, %32 : vector<1x4x4xf32>
    %c0_11 = arith.constant 0 : index
    %c0_12 = arith.constant 0 : index
    %c0_13 = arith.constant 0 : index
    %c0_14 = arith.constant 0 : index
    %34 = vector.load %arg2[%c0_11, %c0_12, %c0_13, %c0_14] : memref<1x8x4x64xf32, #tpu.memory_space<vmem>>, vector<1x8x4x64xf32>
    %35 = vector.shape_cast %7 : vector<8x1xf32> to vector<1x8x1xf32>
    %36 = vector.broadcast %35 : vector<1x8x1xf32> to vector<1x8x4xf32>
    %37 = vector.extract_strided_slice %34 {offsets = [0, 0, 0, 0], sizes = [1, 8, 4, 16], strides = [1, 1, 1, 1]} : vector<1x8x4x64xf32> to vector<1x8x4x16xf32>
    %cst_15 = arith.constant dense<0.000000e+00> : vector<1x8x4xf32>
    %38 = vector.multi_reduction <add>, %37, %cst_15 [3] : vector<1x8x4x16xf32> to vector<1x8x4xf32>
    %cst_16 = arith.constant 1.600000e+01 : f32
    %39 = vector.broadcast %cst_16 : f32 to vector<1x8x4xf32>
    %40 = arith.divf %38, %39 : vector<1x8x4xf32>
    %41 = vector.extract_strided_slice %1 {offsets = [0, 0], sizes = [8, 8], strides = [1, 1]} : vector<8x32xf32> to vector<8x8xf32>
    %42 = vector.shape_cast %41 : vector<8x8xf32> to vector<1x8x8xf32>
    %cst_17 = arith.constant dense<0.000000e+00> : vector<1x8x4xf32>
    %43 = tpu.matmul %42, %40, %cst_17 {dimension_numbers = #tpu.dot_dimension_numbers<[2], [1], [1], [2], [0, 0, 0, 1, 1, 2], [0], [0]>} : vector<1x8x8xf32>, vector<1x8x4xf32>, vector<1x8x4xf32> -> vector<1x8x4xf32>
    %44 = arith.addf %36, %43 : vector<1x8x4xf32>
    %45 = vector.extract_strided_slice %34 {offsets = [0, 0, 0, 16], sizes = [1, 8, 4, 16], strides = [1, 1, 1, 1]} : vector<1x8x4x64xf32> to vector<1x8x4x16xf32>
    %cst_18 = arith.constant dense<0.000000e+00> : vector<1x8x4xf32>
    %46 = vector.multi_reduction <add>, %45, %cst_18 [3] : vector<1x8x4x16xf32> to vector<1x8x4xf32>
    %cst_19 = arith.constant 1.600000e+01 : f32
    %47 = vector.broadcast %cst_19 : f32 to vector<1x8x4xf32>
    %48 = arith.divf %46, %47 : vector<1x8x4xf32>
    %49 = vector.extract_strided_slice %1 {offsets = [0, 8], sizes = [8, 8], strides = [1, 1]} : vector<8x32xf32> to vector<8x8xf32>
    %50 = vector.shape_cast %49 : vector<8x8xf32> to vector<1x8x8xf32>
    %cst_20 = arith.constant dense<0.000000e+00> : vector<1x8x4xf32>
    %51 = tpu.matmul %50, %48, %cst_20 {dimension_numbers = #tpu.dot_dimension_numbers<[2], [1], [1], [2], [0, 0, 0, 1, 1, 2], [0], [0]>} : vector<1x8x8xf32>, vector<1x8x4xf32>, vector<1x8x4xf32> -> vector<1x8x4xf32>
    %52 = arith.addf %44, %51 : vector<1x8x4xf32>
    %53 = vector.extract_strided_slice %34 {offsets = [0, 0, 0, 32], sizes = [1, 8, 4, 16], strides = [1, 1, 1, 1]} : vector<1x8x4x64xf32> to vector<1x8x4x16xf32>
    %cst_21 = arith.constant dense<0.000000e+00> : vector<1x8x4xf32>
    %54 = vector.multi_reduction <add>, %53, %cst_21 [3] : vector<1x8x4x16xf32> to vector<1x8x4xf32>
    %cst_22 = arith.constant 1.600000e+01 : f32
    %55 = vector.broadcast %cst_22 : f32 to vector<1x8x4xf32>
    %56 = arith.divf %54, %55 : vector<1x8x4xf32>
    %57 = vector.extract_strided_slice %1 {offsets = [0, 16], sizes = [8, 8], strides = [1, 1]} : vector<8x32xf32> to vector<8x8xf32>
    %58 = vector.shape_cast %57 : vector<8x8xf32> to vector<1x8x8xf32>
    %cst_23 = arith.constant dense<0.000000e+00> : vector<1x8x4xf32>
    %59 = tpu.matmul %58, %56, %cst_23 {dimension_numbers = #tpu.dot_dimension_numbers<[2], [1], [1], [2], [0, 0, 0, 1, 1, 2], [0], [0]>} : vector<1x8x8xf32>, vector<1x8x4xf32>, vector<1x8x4xf32> -> vector<1x8x4xf32>
    %60 = arith.addf %52, %59 : vector<1x8x4xf32>
    %61 = vector.extract_strided_slice %34 {offsets = [0, 0, 0, 48], sizes = [1, 8, 4, 16], strides = [1, 1, 1, 1]} : vector<1x8x4x64xf32> to vector<1x8x4x16xf32>
    %cst_24 = arith.constant dense<0.000000e+00> : vector<1x8x4xf32>
    %62 = vector.multi_reduction <add>, %61, %cst_24 [3] : vector<1x8x4x16xf32> to vector<1x8x4xf32>
    %cst_25 = arith.constant 1.600000e+01 : f32
    %63 = vector.broadcast %cst_25 : f32 to vector<1x8x4xf32>
    %64 = arith.divf %62, %63 : vector<1x8x4xf32>
    %65 = vector.extract_strided_slice %1 {offsets = [0, 24], sizes = [8, 8], strides = [1, 1]} : vector<8x32xf32> to vector<8x8xf32>
    %66 = vector.shape_cast %65 : vector<8x8xf32> to vector<1x8x8xf32>
    %cst_26 = arith.constant dense<0.000000e+00> : vector<1x8x4xf32>
    %67 = tpu.matmul %66, %64, %cst_26 {dimension_numbers = #tpu.dot_dimension_numbers<[2], [1], [1], [2], [0, 0, 0, 1, 1, 2], [0], [0]>} : vector<1x8x8xf32>, vector<1x8x4xf32>, vector<1x8x4xf32> -> vector<1x8x4xf32>
    %68 = arith.addf %60, %67 : vector<1x8x4xf32>
    %69 = vector.shape_cast %4 : vector<4x8xf32> to vector<1x4x8xf32>
    %cst_27 = arith.constant dense<0.000000e+00> : vector<1x4x4xf32>
    %70 = tpu.matmul %69, %68, %cst_27 {dimension_numbers = #tpu.dot_dimension_numbers<[2], [1], [1], [2], [0, 0, 0, 1, 1, 2], [0], [0]>} : vector<1x4x8xf32>, vector<1x8x4xf32>, vector<1x4x4xf32> -> vector<1x4x4xf32>
    %71 = vector.shape_cast %10 : vector<4x1xf32> to vector<1x4x1xf32>
    %72 = vector.broadcast %71 : vector<1x4x1xf32> to vector<1x4x4xf32>
    %73 = arith.addf %70, %72 : vector<1x4x4xf32>
    %cst_28 = arith.constant 0.000000e+00 : f32
    %74 = vector.broadcast %cst_28 : f32 to vector<1x4x4xf32>
    %75 = arith.maximumf %73, %74 : vector<1x4x4xf32>
    %76 = vector.shape_cast %5 : vector<8x4xf32> to vector<1x8x4xf32>
    %cst_29 = arith.constant dense<0.000000e+00> : vector<1x8x4xf32>
    %77 = tpu.matmul %76, %33, %cst_29 {dimension_numbers = #tpu.dot_dimension_numbers<[2], [1], [1], [2], [0, 0, 0, 1, 1, 2], [0], [0]>} : vector<1x8x4xf32>, vector<1x4x4xf32>, vector<1x8x4xf32> -> vector<1x8x4xf32>
    %78 = vector.shape_cast %6 : vector<8x4xf32> to vector<1x8x4xf32>
    %cst_30 = arith.constant dense<0.000000e+00> : vector<1x8x4xf32>
    %79 = tpu.matmul %78, %75, %cst_30 {dimension_numbers = #tpu.dot_dimension_numbers<[2], [1], [1], [2], [0, 0, 0, 1, 1, 2], [0], [0]>} : vector<1x8x4xf32>, vector<1x4x4xf32>, vector<1x8x4xf32> -> vector<1x8x4xf32>
    %80 = arith.addf %77, %79 : vector<1x8x4xf32>
    %cst_31 = arith.constant 1.000000e+00 : f32
    %81 = vector.broadcast %cst_31 : f32 to vector<1x8x4xf32>
    %82 = arith.addf %80, %81 : vector<1x8x4xf32>
    %c0_32 = arith.constant 0 : index
    %c0_33 = arith.constant 0 : index
    %c0_34 = arith.constant 0 : index
    %83 = vector.load %arg4[%c0_32, %c0_33, %c0_34] : memref<1x8x4xf32, #tpu.memory_space<vmem>>, vector<1x8x4xf32>
    tpu.vector_store %arg4[%c0_32, %c0_33, %c0_34], %82 {strides = array<i32>} : memref<1x8x4xf32, #tpu.memory_space<vmem>>, vector<1x8x4xf32>,
    return
  }
  func.func @transform_0(%arg0: i32) -> (i32, i32, i32, i32) {
    %c0_i32 = arith.constant 0 : i32
    %c0_i32_0 = arith.constant 0 : i32
    %c0_i32_1 = arith.constant 0 : i32
    %c0_i32_2 = arith.constant 0 : i32
    return %arg0, %c0_i32, %c0_i32_0, %c0_i32_1 : i32, i32, i32, i32
  }
  func.func @transform_1(%arg0: i32) -> (i32, i32, i32, i32) {
    %c0_i32 = arith.constant 0 : i32
    %c0_i32_0 = arith.constant 0 : i32
    %c0_i32_1 = arith.constant 0 : i32
    %c0_i32_2 = arith.constant 0 : i32
    return %arg0, %c0_i32, %c0_i32_0, %c0_i32_1 : i32, i32, i32, i32
  }
  func.func @transform_2(%arg0: i32) -> (i32, i32) {
    %c0_i32 = arith.constant 0 : i32
    %c0_i32_0 = arith.constant 0 : i32
    %c0_i32_1 = arith.constant 0 : i32
    return %c0_i32, %c0_i32_0 : i32, i32
  }
  func.func @transform_3(%arg0: i32) -> (i32, i32, i32) {
    %c0_i32 = arith.constant 0 : i32
    %c0_i32_0 = arith.constant 0 : i32
    %c0_i32_1 = arith.constant 0 : i32
    return %arg0, %c0_i32, %c0_i32_0 : i32, i32, i32
  }
}

</mosaic_0001>

<llo_original>
// kernel: tpu_custom_call.1
$region0: #{tpu_custom_call.1}
  #allocation0 [shape = 'u32[]', space=smem, size = 0x4, offset = 0x4, fixed_abs, tag = 'smem constant byte address 0x4 - core index']
  #allocation1 [shape = 'u32[144,128]{1,0:T(1,128)}', space=vmem, size = 0x12000, scoped, tag = 'internal scratch']
  %s0 = inlined_call_operand.hbm [shape: f32[2,8,4,64], index: 0, kind: input, shape index: {}]
  %s1 = inlined_call_operand.hbm [shape: f32[2,8,4,64], index: 1, kind: input, shape index: {}]
  %s2 = inlined_call_operand.hbm [shape: f32[8,68], index: 2, kind: input, shape index: {}]
  %s3 = inlined_call_operand.vmem [shape: f32[2,8,4], index: 3, kind: output, shape index: {}]
  %s4 = sld [smem:[#allocation0]]
  $region57: #{tpu_custom_call.1} parent=0
    _
  %s6 = ssub.s32 1, %s4
  %s7 = scalar_select 0, %s6, %s4
  $region1: #{tpu_custom_call.1} parent=0
    #allocation2 [shape = 'u8[32768]{0}', space=vmem, size = 0x8000, scoped, tag = 'input window, operand 0']
    #allocation3 [shape = 's32[2]{0}', space=sflag, size = 0x8, scoped, tag = 'scoped memory for tpu_custom_call.1']
    #allocation4 [shape = 'u8[32768]{0}', space=vmem, size = 0x8000, scoped, tag = 'input window, operand 1']
    #allocation5 [shape = 's32[2]{0}', space=sflag, size = 0x8, scoped, tag = 'scoped memory for tpu_custom_call.1']
    #allocation6 [shape = 'u8[4096]{0}', space=vmem, size = 0x1000, scoped, tag = 'input window, operand 2, single buffered']
    %8 = vsyncpa [#allocation3], 0
    %s9 = scalar_lea.sflag [#allocation3], 1
    %10 = vsyncpa %s9, 0
    %11 = vsyncpa [#allocation5], 0
    %s12 = scalar_lea.sflag [#allocation5], 1
    %13 = vsyncpa %s12, 0
    loop: start=0, step=1, limit=4
    $region2: #{tpu_custom_call.1} parent=1 // loop_pre_header
      _
    $region3: #{tpu_custom_call.1} parent=1 // loop_header
      %s15 = sphi 0, %s19
      %p16 = scmp.ge.s32.totalorder %s15, 4
      %s25 = sphi 0, %s27
      %s28 = sphi 0, %s25
      %s29 = sphi 0, %s28
      %s45 = sphi 0, %s29
      %s51 = sphi 0, %s53
      %s54 = sphi 0, %s51
      %s55 = sphi 0, %s54
      %s71 = sphi 0, %s55
      %s75 = sphi 0, %s75
      %s77 = sphi 0, %s75
      %s78 = sphi 0, %s77
      %s92 = sphi 0, %s78
      %s98 = sphi 0, %s100
      %s101 = sphi 0, %s98
      %s102 = sphi 0, %s101
      %s118 = sphi 0, %s102
    $region4: #{tpu_custom_call.1} parent=1 // loop_header_branch
      %18 = sbr.rel (%p16) target = $region8
    $region5: #{tpu_custom_call.1} parent=1 // loop_body
      %s20 = ssub.s32 %s15, 1
      %s21 = ssub.s32 %s15, 2
      %s22 = sadd.s32 %s15, 1
      %s23 = ssub.s32 %s15, %s22
      %p24 = scmp.eq.s32.totalorder %s23, 0
      %s26 = sadd.s32 %s25, 1
      %s27 = scalar_select %p24, %s25, %s26
      %p30 = pneg %p24
      %p31 = scmp.eq.s32.totalorder %s15, 1
      %p32 = por %p30, %p31
      %p33 = scmp.ne.s32.totalorder %s25, %s28
      %p34 = scmp.eq.s32.totalorder %s15, 0
      %p35 = por %p33, %p34
      %p36 = scmp.ne.s32.totalorder %s25, %s28
      %p37 = scmp.eq.s32.totalorder %s20, 1
      %p38 = por %p36, %p37
      %p39 = scmp.ne.s32.totalorder %s28, %s29
      %p40 = scmp.eq.s32.totalorder %s20, 0
      %p41 = por %p39, %p40
      %p42 = scmp.ne.s32.totalorder %s28, %s29
      %p43 = scmp.eq.s32.totalorder %s21, 1
      %p44 = por %p42, %p43
      %p46 = scmp.ne.s32.totalorder %s29, %s45
      %p47 = scmp.eq.s32.totalorder %s21, 0
      %p48 = por %p46, %p47
      %s49 = ssub.s32 %s15, %s22
      %p50 = scmp.eq.s32.totalorder %s49, 0
      %s52 = sadd.s32 %s51, 1
      %s53 = scalar_select %p50, %s51, %s52
      %p56 = pneg %p50
      %p57 = scmp.eq.s32.totalorder %s15, 1
      %p58 = por %p56, %p57
      %p59 = scmp.ne.s32.totalorder %s51, %s54
      %p60 = scmp.eq.s32.totalorder %s15, 0
      %p61 = por %p59, %p60
      %p62 = scmp.ne.s32.totalorder %s51, %s54
      %p63 = scmp.eq.s32.totalorder %s20, 1
      %p64 = por %p62, %p63
      %p65 = scmp.ne.s32.totalorder %s54, %s55
      %p66 = scmp.eq.s32.totalorder %s20, 0
      %p67 = por %p65, %p66
      %p68 = scmp.ne.s32.totalorder %s54, %s55
      %p69 = scmp.eq.s32.totalorder %s21, 1
      %p70 = por %p68, %p69
      %p72 = scmp.ne.s32.totalorder %s55, %s71
      %p73 = scmp.eq.s32.totalorder %s21, 0
      %p74 = por %p72, %p73
      %s76 = sadd.s32 %s75, 1
      %p79 = scmp.eq.s32.totalorder %s15, 1
      %p80 = scmp.ne.s32.totalorder %s75, %s77
      %p81 = scmp.eq.s32.totalorder %s15, 0
      %p82 = por %p80, %p81
      %p83 = scmp.ne.s32.totalorder %s75, %s77
      %p84 = scmp.eq.s32.totalorder %s20, 1
      %p85 = por %p83, %p84
      %p86 = scmp.ne.s32.totalorder %s77, %s78
      %p87 = scmp.eq.s32.totalorder %s20, 0
      %p88 = por %p86, %p87
      %p89 = scmp.ne.s32.totalorder %s77, %s78
      %p90 = scmp.eq.s32.totalorder %s21, 1
      %p91 = por %p89, %p90
      %p93 = scmp.ne.s32.totalorder %s78, %s92
      %p94 = scmp.eq.s32.totalorder %s21, 0
      %p95 = por %p93, %p94
      %s96 = ssub.s32 %s15, %s22
      %p97 = scmp.eq.s32.totalorder %s96, 0
      %s99 = sadd.s32 %s98, 1
      %s100 = scalar_select %p97, %s98, %s99
      %p103 = pneg %p97
      %p104 = scmp.eq.s32.totalorder %s15, 1
      %p105 = por %p103, %p104
      %p106 = scmp.ne.s32.totalorder %s98, %s101
      %p107 = scmp.eq.s32.totalorder %s15, 0
      %p108 = por %p106, %p107
      %p109 = scmp.ne.s32.totalorder %s98, %s101
      %p110 = scmp.eq.s32.totalorder %s20, 1
      %p111 = por %p109, %p110
      %p112 = scmp.ne.s32.totalorder %s101, %s102
      %p113 = scmp.eq.s32.totalorder %s20, 0
      %p114 = por %p112, %p113
      %p115 = scmp.ne.s32.totalorder %s101, %s102
      %p116 = scmp.eq.s32.totalorder %s21, 1
      %p117 = por %p115, %p116
      %p119 = scmp.ne.s32.totalorder %s102, %s118
      %p120 = scmp.eq.s32.totalorder %s21, 0
      %p121 = por %p119, %p120
      %p122 = scmp.le.s32.totalorder 1, %s15
      %p123 = scmp.lt.s32.totalorder %s15, 3
      %p124 = pnand %p122, %p123
      %p125 = pneg %p124
      // Predicated region
      $region9: #{tpu_custom_call.1} parent=5 // pred_check
        _
      $region10: #{tpu_custom_call.1} parent=5 // pred_check_branch
        %127 = sbr.rel (%p124) target = $region12
      $region11: #{tpu_custom_call.1} parent=5 // pred_region
        %s128 = ssub.s32 %s15, 1
        // Predicated region
        $region13: #{tpu_custom_call.1} parent=11 // pred_check
          %p129 = pneg %p88
        $region14: #{tpu_custom_call.1} parent=11 // pred_check_branch
          %131 = sbr.rel (%p129) target = $region16
        $region15: #{tpu_custom_call.1} parent=11 // pred_region
          %s133 = ssub.s32 128, 128
          %134 = vsyncadd [#allocation5], %s133
          %s136 = sshll.u32 [#allocation6], 4
          %s137 = int_to_ptr.vmem [resolvable:$true] %s136
          %139 = dma.hbm_to_vmem [thread:$0]  %s2, 128, %s137, [#allocation5]
        $region16: #{tpu_custom_call.1} parent=11 // pred_fallthru
          _
      $region12: #{tpu_custom_call.1} parent=5 // pred_fallthru
        _
      %p140 = scmp.lt.s32.totalorder %s15, 2
      // Predicated region
      $region17: #{tpu_custom_call.1} parent=5 // pred_check
        %p141 = pneg %p140
      $region18: #{tpu_custom_call.1} parent=5 // pred_check_branch
        %143 = sbr.rel (%p141) target = $region20
      $region19: #{tpu_custom_call.1} parent=5 // pred_region
        // Predicated region
        $region21: #{tpu_custom_call.1} parent=19 // pred_check
          %p144 = pneg %p35
        $region22: #{tpu_custom_call.1} parent=19 // pred_check_branch
          %146 = sbr.rel (%p144) target = $region24
        $region23: #{tpu_custom_call.1} parent=19 // pred_region
          %s147 = sand.u32 %s25, 1
          %s148 = scalar_lea.sflag [#allocation3], %s147
          %s149 = sand.u32 %s25, 1
          %s150 = smul.addr %s149, 32
          %s151 = scalar_lea.vmem [#allocation2], %s150
          %s153 = ssub.s32 512, 512
          %154 = vsyncadd %s148, %s153
          %s155 = smul.addr %s15, 8
          %s156 = smul.addr %s155, 64
          %s157 = scalar_lea.hbm %s0, %s156
          %s158 = sshll.u32 %s151, 4
          %s159 = int_to_ptr.vmem [resolvable:$true] %s158
          %164 = dma.hbm_to_vmem [thread:$0]  %s157, 512, %s159, %s148, 64, 64, 4
        $region24: #{tpu_custom_call.1} parent=19 // pred_fallthru
          _
        // Predicated region
        $region25: #{tpu_custom_call.1} parent=19 // pred_check
          %p165 = pneg %p61
        $region26: #{tpu_custom_call.1} parent=19 // pred_check_branch
          %167 = sbr.rel (%p165) target = $region28
        $region27: #{tpu_custom_call.1} parent=19 // pred_region
          %s168 = sand.u32 %s15, 1
          %s169 = scalar_lea.sflag [#allocation5], %s168
          %s170 = sand.u32 %s51, 1
          %s171 = smul.addr %s170, 32
          %s172 = scalar_lea.vmem [#allocation4], %s171
          %s174 = ssub.s32 512, 512
          %175 = vsyncadd %s169, %s174
          %s176 = smul.addr %s15, 8
          %s177 = smul.addr %s176, 64
          %s178 = scalar_lea.hbm %s1, %s177
          %s179 = sshll.u32 %s172, 4
          %s180 = int_to_ptr.vmem [resolvable:$true] %s179
          %185 = dma.hbm_to_vmem [thread:$0]  %s178, 512, %s180, %s169, 64, 64, 4
        $region28: #{tpu_custom_call.1} parent=19 // pred_fallthru
          _
      $region20: #{tpu_custom_call.1} parent=5 // pred_fallthru
        _
      %p186 = scmp.le.s32.totalorder 1, %s15
      %p187 = scmp.lt.s32.totalorder %s15, 3
      %p188 = pnand %p186, %p187
      %p189 = pneg %p188
      // Predicated region
      $region29: #{tpu_custom_call.1} parent=5 // pred_check
        _
      $region30: #{tpu_custom_call.1} parent=5 // pred_check_branch
        %191 = sbr.rel (%p188) target = $region32
      $region31: #{tpu_custom_call.1} parent=5 // pred_region
        %s192 = ssub.s32 %s15, 1
        %s193 = sand.u32 %s28, 1
        %s194 = scalar_lea.sflag [#allocation3], %s193
        %s195 = sand.u32 %s28, 1
        %s196 = smul.addr %s195, 32
        %s197 = scalar_lea.vmem [#allocation2], %s196
        // Predicated region
        $region33: #{tpu_custom_call.1} parent=31 // pred_check
          %p198 = pneg %p41
        $region34: #{tpu_custom_call.1} parent=31 // pred_check_branch
          %200 = sbr.rel (%p198) target = $region36
        $region35: #{tpu_custom_call.1} parent=31 // pred_region
          %201 = dma.done %s194, 512
        $region36: #{tpu_custom_call.1} parent=31 // pred_fallthru
          _
        %s202 = sand.u32 %s20, 1
        %s203 = scalar_lea.sflag [#allocation5], %s202
        %s204 = sand.u32 %s54, 1
        %s205 = smul.addr %s204, 32
        %s206 = scalar_lea.vmem [#allocation4], %s205
        // Predicated region
        $region37: #{tpu_custom_call.1} parent=31 // pred_check
          %p207 = pneg %p67
        $region38: #{tpu_custom_call.1} parent=31 // pred_check_branch
          %209 = sbr.rel (%p207) target = $region40
        $region39: #{tpu_custom_call.1} parent=31 // pred_region
          %210 = dma.done %s203, 512
        $region40: #{tpu_custom_call.1} parent=31 // pred_fallthru
          _
        // Predicated region
        $region41: #{tpu_custom_call.1} parent=31 // pred_check
          %p211 = pneg %p88
        $region42: #{tpu_custom_call.1} parent=31 // pred_check_branch
          %213 = sbr.rel (%p211) target = $region44
        $region43: #{tpu_custom_call.1} parent=31 // pred_region
          %214 = dma.done [#allocation5], 128
        $region44: #{tpu_custom_call.1} parent=31 // pred_fallthru
          _
        %s215 = sand.u32 %s28, 1
        %s216 = scalar_lea.sflag [#allocation3], %s215
        %s217 = sand.u32 %s28, 1
        %s218 = smul.addr %s217, 32
        %s219 = scalar_lea.vmem [#allocation2], %s218
        %p220 = pneg %p41
        %p221 = pneg %p38
        %s222 = sand.u32 %s20, 1
        %s223 = scalar_lea.sflag [#allocation5], %s222
        %s224 = sand.u32 %s54, 1
        %s225 = smul.addr %s224, 32
        %s226 = scalar_lea.vmem [#allocation4], %s225
        %p227 = pneg %p67
        %p228 = pneg %p64
        %p229 = pneg %p88
        %p230 = pneg %p85
        %p231 = pneg %p114
        %p232 = pneg %p111
        %p233 = scmp.lt.s32.totalorder %s20, 1
        %s234 = scalar_select %p233, %s20, 1
        %s235 = smul.addr %s234, 8
        %s236 = scalar_lea.vmem %s3, %s235
        %p237 = scmp.lt.s32.totalorder %s20, 1
        %s238 = scalar_select %p237, %s20, 1
        %s239 = smul.addr %s238, 8
        %s240 = scalar_lea.vmem %s3, %s239
        %v241 = vld [vmem:[#allocation6] sm:$0xff]
        %v242 = vld [vmem:[%s197] sm:$0xf]
        %v243 = vld [vmem:[%s197 + $0x4] sm:$0xf]
        %v244 = vld [vmem:[%s197 + $0x8] sm:$0xf]
        %v245 = vld [vmem:[%s197 + $0xc] sm:$0xf]
        %v246 = vld [vmem:[%s197 + $0x10] sm:$0xf]
        %v247 = vld [vmem:[%s197 + $0x14] sm:$0xf]
        %v248 = vld [vmem:[%s197 + $0x18] sm:$0xf]
        %v249 = vld [vmem:[%s197 + $0x1c] sm:$0xf]
        %vm250 = vcmask 519168
        %v251 = vsel %vm250, %v242, 0.0
        %252 = vadd.xlane.f32.xlu0 %v251
        %v253 = vpop.xlane.xlu0 %252
        %v254 = vsel %vm250, %v243, 0.0
        %255 = vadd.xlane.f32.xlu0 %v254
        %v256 = vpop.xlane.xlu0 %255
        %v257 = vsel %vm250, %v244, 0.0
        %258 = vadd.xlane.f32.xlu0 %v257
        %v259 = vpop.xlane.xlu0 %258
        %v260 = vsel %vm250, %v245, 0.0
        %261 = vadd.xlane.f32.xlu0 %v260
        %v262 = vpop.xlane.xlu0 %261
        %v263 = vsel %vm250, %v246, 0.0
        %264 = vadd.xlane.f32.xlu0 %v263
        %v265 = vpop.xlane.xlu0 %264
        %v266 = vsel %vm250, %v247, 0.0
        %267 = vadd.xlane.f32.xlu0 %v266
        %v268 = vpop.xlane.xlu0 %267
        %v269 = vsel %vm250, %v248, 0.0
        %270 = vadd.xlane.f32.xlu0 %v269
        %v271 = vpop.xlane.xlu0 %270
        %v272 = vsel %vm250, %v249, 0.0
        %273 = vadd.xlane.f32.xlu0 %v272
        %v274 = vpop.xlane.xlu0 %273
        %v275 = vrcp.pop 64.0
        %v276 = vmul.f32 %v253, %v275
        %v277 = vmul.f32 %v256, %v275
        %v278 = vmul.f32 %v259, %v275
        %v279 = vmul.f32 %v262, %v275
        %v280 = vmul.f32 %v265, %v275
        %v281 = vmul.f32 %v268, %v275
        %v282 = vmul.f32 %v271, %v275
        %v283 = vmul.f32 %v274, %v275
        %v292 = vlaneseq
        %v293 = vand.u32 %v292, 127
        %v294 = vlaneseq
        %v295 = vshrl.u32 %v294, 7
        %v296 = vsub.s32 %v293, %v295
        %v297 = vrot.slane %v276, %v296
        %v298 = vlaneseq
        %v299 = vshrl.u32 %v298, 7
        %v300 = vsub.s32 %v293, %v299
        %v301 = vrot.slane %v277, %v300
        %v302 = vlaneseq
        %v303 = vshrl.u32 %v302, 7
        %v304 = vsub.s32 %v293, %v303
        %v305 = vrot.slane %v278, %v304
        %v306 = vlaneseq
        %v307 = vshrl.u32 %v306, 7
        %v308 = vsub.s32 %v293, %v307
        %v309 = vrot.slane %v279, %v308
        %v310 = vlaneseq
        %v311 = vshrl.u32 %v310, 7
        %v312 = vsub.s32 %v293, %v311
        %v313 = vrot.slane %v280, %v312
        %v314 = vlaneseq
        %v315 = vshrl.u32 %v314, 7
        %v316 = vsub.s32 %v293, %v315
        %v317 = vrot.slane %v281, %v316
        %v318 = vlaneseq
        %v319 = vshrl.u32 %v318, 7
        %v320 = vsub.s32 %v293, %v319
        %v321 = vrot.slane %v282, %v320
        %v322 = vlaneseq
        %v323 = vshrl.u32 %v322, 7
        %v324 = vsub.s32 %v293, %v323
        %v325 = vrot.slane %v283, %v324
        %vm326 = vcmask 1041409
        %v327 = vsel %vm326, %v301, %v297
        %vm328 = vcmask 1042434
        %v329 = vsel %vm328, %v305, %v327
        %vm330 = vcmask 1043459
        %v331 = vsel %vm330, %v309, %v329
        %vm332 = vcmask 1044484
        %v333 = vsel %vm332, %v313, %v331
        %vm334 = vcmask 1045509
        %v335 = vsel %vm334, %v317, %v333
        %vm336 = vcmask 1046534
        %v337 = vsel %vm336, %v321, %v335
        %vm338 = vcmask 1047559
        %v339 = vsel %vm338, %v325, %v337
        %vm341 = vcmask 31744
        %v342 = vsel %vm341, %v339, 0.0
        %343 = vadd.xlane.f32.xlu0 %v342
        %v344 = vpop.xlane.xlu0 %343
        %v345 = vrcp.pop 4.0
        %v346 = vmul.f32 %v344, %v345
        %348 = vset.pattern.permute.xlu0 65
        %349 = vperm.xlu0 %348, %v241
        %v350 = vpop.permute.xlu0 %349
        %352 = vrot.lane.b32.xlu0 %v241, 96
        %v353 = vpop.permute.xlu0 %352
        %vm354 = vcmask 64512
        %v355 = vsel %vm354, %v353, 0
        %357 = vmatprep.subr.mxu0 0.0
        %358 = vmatpush1.msra.mxu0 0.0
        %359 = vmatprep.subr.mxu0 0.0
        %360 = vmatpush1.msra.mxu0 0.0
        %361 = vmatprep.subr.mxu0 0.0
        %362 = vmatpush1.msra.mxu0 0.0
        %363 = vmatprep.subr.mxu0 0.0
        %364 = vmatpush1.msra.mxu0 0.0
        %365 = vmatprep.subr.mxu0 0.0
        %366 = vmatpush1.msra.mxu0 0.0
        %367 = vmatprep.subr.mxu0 0.0
        %368 = vmatpush1.msra.mxu0 0.0
        %369 = vmatprep.subr.mxu0 0.0
        %370 = vmatpush1.msra.mxu0 0.0
        %371 = vmatprep.subr.mxu0 0.0
        %372 = vmatpush1.msra.mxu0 0.0
        %373 = vmatprep.subr.mxu0 0.0
        %374 = vmatpush1.msra.mxu0 0.0
        %375 = vmatprep.subr.mxu0 0.0
        %376 = vmatpush1.msra.mxu0 0.0
        %377 = vmatprep.subr.mxu0 0.0
        %378 = vmatpush1.msra.mxu0 0.0
        %379 = vmatprep.subr.mxu0 0.0
        %380 = vmatpush1.msra.mxu0 0.0
        %381 = vmatprep.subr.mxu0 0.0
        %382 = vmatpush1.msra.mxu0 0.0
        %383 = vmatprep.subr.mxu0 0.0
        %384 = vmatpush1.msra.mxu0 0.0
        %385 = vmatprep.subr.mxu0 0.0
        %386 = vmatpush1.msra.mxu0 0.0
        %387 = vmatprep.subr.mxu0 0.0
        %388 = vmatpush1.msra.mxu0 %v346
        %389 = vmatprep.subr.mxu0 0.0
        %390 = vmatpush2.msra.mxu0 0.0
        %391 = vmatprep.subr.mxu0 0.0
        %392 = vmatpush2.msra.mxu0 0.0
        %393 = vmatprep.subr.mxu0 0.0
        %394 = vmatpush2.msra.mxu0 0.0
        %395 = vmatprep.subr.mxu0 0.0
        %396 = vmatpush2.msra.mxu0 0.0
        %397 = vmatprep.subr.mxu0 0.0
        %398 = vmatpush2.msra.mxu0 0.0
        %399 = vmatprep.subr.mxu0 0.0
        %400 = vmatpush2.msra.mxu0 0.0
        %401 = vmatprep.subr.mxu0 0.0
        %402 = vmatpush2.msra.mxu0 0.0
        %403 = vmatprep.subr.mxu0 0.0
        %404 = vmatpush2.msra.mxu0 0.0
        %405 = vmatprep.subr.mxu0 0.0
        %406 = vmatpush2.msra.mxu0 0.0
        %407 = vmatprep.subr.mxu0 0.0
        %408 = vmatpush2.msra.mxu0 0.0
        %409 = vmatprep.subr.mxu0 0.0
        %410 = vmatpush2.msra.mxu0 0.0
        %411 = vmatprep.subr.mxu0 0.0
        %412 = vmatpush2.msra.mxu0 0.0
        %413 = vmatprep.subr.mxu0 0.0
        %414 = vmatpush2.msra.mxu0 0.0
        %415 = vmatprep.subr.mxu0 0.0
        %416 = vmatpush2.msra.mxu0 0.0
        %417 = vmatprep.subr.mxu0 0.0
        %418 = vmatpush2.msra.mxu0 0.0
        %419 = vmatprep.subr.mxu0 0.0
        %420 = vmatpush2.msra.mxu0 0.0
        %421 = vmatprep.mubr.f32.mxu0 0.0
        %422 = vmatmul.mubr.f32.gmra.mxu0 %v355
        %v423 = vpop.f32.mrf.mxu0
        %v424 = vadd.f32 %v350, %v423
        %v425 = vpop.f32.mrf.mxu0
        %426 = vdwg.mxu0
        %v428 = vlaneseq
        %v429 = vshrl.u32 %v428, 7
        %v430 = vsub.s32 0, %v429
        %v431 = vrot.slane %v424, %v430
        %433 = vbcast.lane.b32.xlu0 %v431, 256
        %v434 = vpop.permute.xlu0 %433
        %v435 = vlaneseq
        %v436 = vshrl.u32 %v435, 7
        %v437 = vsub.s32 1, %v436
        %v438 = vrot.slane %v424, %v437
        %440 = vbcast.lane.b32.xlu0 %v438, 256
        %v441 = vpop.permute.xlu0 %440
        %v442 = vlaneseq
        %v443 = vshrl.u32 %v442, 7
        %v444 = vsub.s32 2, %v443
        %v445 = vrot.slane %v424, %v444
        %447 = vbcast.lane.b32.xlu0 %v445, 256
        %v448 = vpop.permute.xlu0 %447
        %v449 = vlaneseq
        %v450 = vshrl.u32 %v449, 7
        %v451 = vsub.s32 3, %v450
        %v452 = vrot.slane %v424, %v451
        %454 = vbcast.lane.b32.xlu0 %v452, 256
        %v455 = vpop.permute.xlu0 %454
        %v456 = vlaneseq
        %v457 = vshrl.u32 %v456, 7
        %v458 = vsub.s32 4, %v457
        %v459 = vrot.slane %v424, %v458
        %461 = vbcast.lane.b32.xlu0 %v459, 256
        %v462 = vpop.permute.xlu0 %461
        %v463 = vlaneseq
        %v464 = vshrl.u32 %v463, 7
        %v465 = vsub.s32 5, %v464
        %v466 = vrot.slane %v424, %v465
        %468 = vbcast.lane.b32.xlu0 %v466, 256
        %v469 = vpop.permute.xlu0 %468
        %v470 = vlaneseq
        %v471 = vshrl.u32 %v470, 7
        %v472 = vsub.s32 6, %v471
        %v473 = vrot.slane %v424, %v472
        %475 = vbcast.lane.b32.xlu0 %v473, 256
        %v476 = vpop.permute.xlu0 %475
        %v477 = vlaneseq
        %v478 = vshrl.u32 %v477, 7
        %v479 = vsub.s32 7, %v478
        %v480 = vrot.slane %v424, %v479
        %482 = vbcast.lane.b32.xlu0 %v480, 256
        %v483 = vpop.permute.xlu0 %482
        %v492 = vadd.f32 %v276, %v434
        %v493 = vadd.f32 %v277, %v441
        %v494 = vadd.f32 %v278, %v448
        %v495 = vadd.f32 %v279, %v455
        %v496 = vadd.f32 %v280, %v462
        %v497 = vadd.f32 %v281, %v469
        %v498 = vadd.f32 %v282, %v476
        %v499 = vadd.f32 %v283, %v483
        %500 = vset.pattern.permute.xlu0 66
        %501 = vperm.xlu0 %500, %v241
        %v502 = vpop.permute.xlu0 %501
        %504 = vrot.lane.b32.xlu0 %v241, 88
        %v505 = vpop.permute.xlu0 %504
        %514 = vset.pattern.permute.xlu0 0
        %515 = vperm.xlu0 %514, %v492
        %v516 = vpop.permute.xlu0 %515
        %517 = vset.pattern.permute.xlu0 0
        %518 = vperm.xlu0 %517, %v493
        %v519 = vpop.permute.xlu0 %518
        %520 = vset.pattern.permute.xlu0 0
        %521 = vperm.xlu0 %520, %v494
        %v522 = vpop.permute.xlu0 %521
        %523 = vset.pattern.permute.xlu0 0
        %524 = vperm.xlu0 %523, %v495
        %v525 = vpop.permute.xlu0 %524
        %526 = vset.pattern.permute.xlu0 0
        %527 = vperm.xlu0 %526, %v496
        %v528 = vpop.permute.xlu0 %527
        %529 = vset.pattern.permute.xlu0 0
        %530 = vperm.xlu0 %529, %v497
        %v531 = vpop.permute.xlu0 %530
        %532 = vset.pattern.permute.xlu0 0
        %533 = vperm.xlu0 %532, %v498
        %v534 = vpop.permute.xlu0 %533
        %535 = vset.pattern.permute.xlu0 0
        %536 = vperm.xlu0 %535, %v499
        %v537 = vpop.permute.xlu0 %536
        %v538 = vlaneseq
        %v539 = vshrl.u32 %v538, 7
        %v540 = vsub.s32 %v293, %v539
        %v541 = vrot.slane %v516, %v540
        %v542 = vlaneseq
        %v543 = vshrl.u32 %v542, 7
        %v544 = vsub.s32 %v293, %v543
        %v545 = vrot.slane %v519, %v544
        %v546 = vlaneseq
        %v547 = vshrl.u32 %v546, 7
        %v548 = vsub.s32 %v293, %v547
        %v549 = vrot.slane %v522, %v548
        %v550 = vlaneseq
        %v551 = vshrl.u32 %v550, 7
        %v552 = vsub.s32 %v293, %v551
        %v553 = vrot.slane %v525, %v552
        %v554 = vlaneseq
        %v555 = vshrl.u32 %v554, 7
        %v556 = vsub.s32 %v293, %v555
        %v557 = vrot.slane %v528, %v556
        %v558 = vlaneseq
        %v559 = vshrl.u32 %v558, 7
        %v560 = vsub.s32 %v293, %v559
        %v561 = vrot.slane %v531, %v560
        %v562 = vlaneseq
        %v563 = vshrl.u32 %v562, 7
        %v564 = vsub.s32 %v293, %v563
        %v565 = vrot.slane %v534, %v564
        %v566 = vlaneseq
        %v567 = vshrl.u32 %v566, 7
        %v568 = vsub.s32 %v293, %v567
        %v569 = vrot.slane %v537, %v568
        %v570 = vsel %vm326, %v545, %v541
        %v571 = vsel %vm328, %v549, %v570
        %v572 = vsel %vm330, %v553, %v571
        %v573 = vsel %vm332, %v557, %v572
        %v574 = vsel %vm334, %v561, %v573
        %v575 = vsel %vm336, %v565, %v574
        %v576 = vsel %vm338, %v569, %v575
        %v578 = vsel %vm354, %v505, 0
        %580 = vmatprep.subr.mxu0 0.0
        %581 = vmatpush1.msra.mxu0 0.0
        %582 = vmatprep.subr.mxu0 0.0
        %583 = vmatpush1.msra.mxu0 0.0
        %584 = vmatprep.subr.mxu0 0.0
        %585 = vmatpush1.msra.mxu0 0.0
        %586 = vmatprep.subr.mxu0 0.0
        %587 = vmatpush1.msra.mxu0 0.0
        %588 = vmatprep.subr.mxu0 0.0
        %589 = vmatpush1.msra.mxu0 0.0
        %590 = vmatprep.subr.mxu0 0.0
        %591 = vmatpush1.msra.mxu0 0.0
        %592 = vmatprep.subr.mxu0 0.0
        %593 = vmatpush1.msra.mxu0 0.0
        %594 = vmatprep.subr.mxu0 0.0
        %595 = vmatpush1.msra.mxu0 0.0
        %596 = vmatprep.subr.mxu0 0.0
        %597 = vmatpush1.msra.mxu0 0.0
        %598 = vmatprep.subr.mxu0 0.0
        %599 = vmatpush1.msra.mxu0 0.0
        %600 = vmatprep.subr.mxu0 0.0
        %601 = vmatpush1.msra.mxu0 0.0
        %602 = vmatprep.subr.mxu0 0.0
        %603 = vmatpush1.msra.mxu0 0.0
        %604 = vmatprep.subr.mxu0 0.0
        %605 = vmatpush1.msra.mxu0 0.0
        %606 = vmatprep.subr.mxu0 0.0
        %607 = vmatpush1.msra.mxu0 0.0
        %608 = vmatprep.subr.mxu0 0.0
        %609 = vmatpush1.msra.mxu0 0.0
        %610 = vmatprep.subr.mxu0 0.0
        %611 = vmatpush1.msra.mxu0 %v576
        %612 = vmatprep.subr.mxu0 0.0
        %613 = vmatpush2.msra.mxu0 0.0
        %614 = vmatprep.subr.mxu0 0.0
        %615 = vmatpush2.msra.mxu0 0.0
        %616 = vmatprep.subr.mxu0 0.0
        %617 = vmatpush2.msra.mxu0 0.0
        %618 = vmatprep.subr.mxu0 0.0
        %619 = vmatpush2.msra.mxu0 0.0
        %620 = vmatprep.subr.mxu0 0.0
        %621 = vmatpush2.msra.mxu0 0.0
        %622 = vmatprep.subr.mxu0 0.0
        %623 = vmatpush2.msra.mxu0 0.0
        %624 = vmatprep.subr.mxu0 0.0
        %625 = vmatpush2.msra.mxu0 0.0
        %626 = vmatprep.subr.mxu0 0.0
        %627 = vmatpush2.msra.mxu0 0.0
        %628 = vmatprep.subr.mxu0 0.0
        %629 = vmatpush2.msra.mxu0 0.0
        %630 = vmatprep.subr.mxu0 0.0
        %631 = vmatpush2.msra.mxu0 0.0
        %632 = vmatprep.subr.mxu0 0.0
        %633 = vmatpush2.msra.mxu0 0.0
        %634 = vmatprep.subr.mxu0 0.0
        %635 = vmatpush2.msra.mxu0 0.0
        %636 = vmatprep.subr.mxu0 0.0
        %637 = vmatpush2.msra.mxu0 0.0
        %638 = vmatprep.subr.mxu0 0.0
        %639 = vmatpush2.msra.mxu0 0.0
        %640 = vmatprep.subr.mxu0 0.0
        %641 = vmatpush2.msra.mxu0 0.0
        %642 = vmatprep.subr.mxu0 0.0
        %643 = vmatpush2.msra.mxu0 0.0
        %644 = vmatprep.mubr.f32.mxu0 0.0
        %645 = vmatmul.mubr.f32.gmra.mxu0 %v578
        %v646 = vpop.f32.mrf.mxu0
        %v647 = vadd.f32 %v502, %v646
        %v648 = vpop.f32.mrf.mxu0
        %649 = vdwg.mxu0
        %v650 = vmax.f32 %v647, 0.0
        %v651 = vld [vmem:[%s206] sm:$0xf]
        %v652 = vld [vmem:[%s206 + $0x4] sm:$0xf]
        %v653 = vld [vmem:[%s206 + $0x8] sm:$0xf]
        %v654 = vld [vmem:[%s206 + $0xc] sm:$0xf]
        %v655 = vld [vmem:[%s206 + $0x10] sm:$0xf]
        %v656 = vld [vmem:[%s206 + $0x14] sm:$0xf]
        %v657 = vld [vmem:[%s206 + $0x18] sm:$0xf]
        %v658 = vld [vmem:[%s206 + $0x1c] sm:$0xf]
        %659 = vset.pattern.permute.xlu0 64
        %660 = vperm.xlu0 %659, %v241
        %v661 = vpop.permute.xlu0 %660
        %vm663 = vcmask 125952
        %v664 = vsel %vm663, %v651, 0.0
        %665 = vadd.xlane.f32.xlu0 %v664
        %v666 = vpop.xlane.xlu0 %665
        %v667 = vsel %vm663, %v652, 0.0
        %668 = vadd.xlane.f32.xlu0 %v667
        %v669 = vpop.xlane.xlu0 %668
        %v670 = vsel %vm663, %v653, 0.0
        %671 = vadd.xlane.f32.xlu0 %v670
        %v672 = vpop.xlane.xlu0 %671
        %v673 = vsel %vm663, %v654, 0.0
        %674 = vadd.xlane.f32.xlu0 %v673
        %v675 = vpop.xlane.xlu0 %674
        %v676 = vsel %vm663, %v655, 0.0
        %677 = vadd.xlane.f32.xlu0 %v676
        %v678 = vpop.xlane.xlu0 %677
        %v679 = vsel %vm663, %v656, 0.0
        %680 = vadd.xlane.f32.xlu0 %v679
        %v681 = vpop.xlane.xlu0 %680
        %v682 = vsel %vm663, %v657, 0.0
        %683 = vadd.xlane.f32.xlu0 %v682
        %v684 = vpop.xlane.xlu0 %683
        %v685 = vsel %vm663, %v658, 0.0
        %686 = vadd.xlane.f32.xlu0 %v685
        %v687 = vpop.xlane.xlu0 %686
        %v688 = vrcp.pop 16.0
        %v689 = vmul.f32 %v666, %v688
        %v690 = vmul.f32 %v669, %v688
        %v691 = vmul.f32 %v672, %v688
        %v692 = vmul.f32 %v675, %v688
        %v693 = vmul.f32 %v678, %v688
        %v694 = vmul.f32 %v681, %v688
        %v695 = vmul.f32 %v684, %v688
        %v696 = vmul.f32 %v687, %v688
        %v705 = vlaneseq
        %v706 = vshrl.u32 %v705, 7
        %v707 = vsub.s32 %v293, %v706
        %v708 = vrot.slane %v689, %v707
        %v709 = vlaneseq
        %v710 = vshrl.u32 %v709, 7
        %v711 = vsub.s32 %v293, %v710
        %v712 = vrot.slane %v690, %v711
        %v713 = vlaneseq
        %v714 = vshrl.u32 %v713, 7
        %v715 = vsub.s32 %v293, %v714
        %v716 = vrot.slane %v691, %v715
        %v717 = vlaneseq
        %v718 = vshrl.u32 %v717, 7
        %v719 = vsub.s32 %v293, %v718
        %v720 = vrot.slane %v692, %v719
        %v721 = vlaneseq
        %v722 = vshrl.u32 %v721, 7
        %v723 = vsub.s32 %v293, %v722
        %v724 = vrot.slane %v693, %v723
        %v725 = vlaneseq
        %v726 = vshrl.u32 %v725, 7
        %v727 = vsub.s32 %v293, %v726
        %v728 = vrot.slane %v694, %v727
        %v729 = vlaneseq
        %v730 = vshrl.u32 %v729, 7
        %v731 = vsub.s32 %v293, %v730
        %v732 = vrot.slane %v695, %v731
        %v733 = vlaneseq
        %v734 = vshrl.u32 %v733, 7
        %v735 = vsub.s32 %v293, %v734
        %v736 = vrot.slane %v696, %v735
        %v737 = vsel %vm326, %v712, %v708
        %v738 = vsel %vm328, %v716, %v737
        %v739 = vsel %vm330, %v720, %v738
        %v740 = vsel %vm332, %v724, %v739
        %v741 = vsel %vm334, %v728, %v740
        %v742 = vsel %vm336, %v732, %v741
        %v743 = vsel %vm338, %v736, %v742
        %v745 = vsel %vm354, %v241, 0
        %747 = vmatprep.subr.mxu0 0.0
        %748 = vmatpush1.msra.mxu0 0.0
        %749 = vmatprep.subr.mxu0 0.0
        %750 = vmatpush1.msra.mxu0 0.0
        %751 = vmatprep.subr.mxu0 0.0
        %752 = vmatpush1.msra.mxu0 0.0
        %753 = vmatprep.subr.mxu0 0.0
        %754 = vmatpush1.msra.mxu0 0.0
        %755 = vmatprep.subr.mxu0 0.0
        %756 = vmatpush1.msra.mxu0 0.0
        %757 = vmatprep.subr.mxu0 0.0
        %758 = vmatpush1.msra.mxu0 0.0
        %759 = vmatprep.subr.mxu0 0.0
        %760 = vmatpush1.msra.mxu0 0.0
        %761 = vmatprep.subr.mxu0 0.0
        %762 = vmatpush1.msra.mxu0 0.0
        %763 = vmatprep.subr.mxu0 0.0
        %764 = vmatpush1.msra.mxu0 0.0
        %765 = vmatprep.subr.mxu0 0.0
        %766 = vmatpush1.msra.mxu0 0.0
        %767 = vmatprep.subr.mxu0 0.0
        %768 = vmatpush1.msra.mxu0 0.0
        %769 = vmatprep.subr.mxu0 0.0
        %770 = vmatpush1.msra.mxu0 0.0
        %771 = vmatprep.subr.mxu0 0.0
        %772 = vmatpush1.msra.mxu0 0.0
        %773 = vmatprep.subr.mxu0 0.0
        %774 = vmatpush1.msra.mxu0 0.0
        %775 = vmatprep.subr.mxu0 0.0
        %776 = vmatpush1.msra.mxu0 0.0
        %777 = vmatprep.subr.mxu0 0.0
        %778 = vmatpush1.msra.mxu0 %v743
        %779 = vmatprep.subr.mxu0 0.0
        %780 = vmatpush2.msra.mxu0 0.0
        %781 = vmatprep.subr.mxu0 0.0
        %782 = vmatpush2.msra.mxu0 0.0
        %783 = vmatprep.subr.mxu0 0.0
        %784 = vmatpush2.msra.mxu0 0.0
        %785 = vmatprep.subr.mxu0 0.0
        %786 = vmatpush2.msra.mxu0 0.0
        %787 = vmatprep.subr.mxu0 0.0
        %788 = vmatpush2.msra.mxu0 0.0
        %789 = vmatprep.subr.mxu0 0.0
        %790 = vmatpush2.msra.mxu0 0.0
        %791 = vmatprep.subr.mxu0 0.0
        %792 = vmatpush2.msra.mxu0 0.0
        %793 = vmatprep.subr.mxu0 0.0
        %794 = vmatpush2.msra.mxu0 0.0
        %795 = vmatprep.subr.mxu0 0.0
        %796 = vmatpush2.msra.mxu0 0.0
        %797 = vmatprep.subr.mxu0 0.0
        %798 = vmatpush2.msra.mxu0 0.0
        %799 = vmatprep.subr.mxu0 0.0
        %800 = vmatpush2.msra.mxu0 0.0
        %801 = vmatprep.subr.mxu0 0.0
        %802 = vmatpush2.msra.mxu0 0.0
        %803 = vmatprep.subr.mxu0 0.0
        %804 = vmatpush2.msra.mxu0 0.0
        %805 = vmatprep.subr.mxu0 0.0
        %806 = vmatpush2.msra.mxu0 0.0
        %807 = vmatprep.subr.mxu0 0.0
        %808 = vmatpush2.msra.mxu0 0.0
        %809 = vmatprep.subr.mxu0 0.0
        %810 = vmatpush2.msra.mxu0 0.0
        %811 = vmatprep.mubr.f32.mxu0 0.0
        %812 = vmatmul.mubr.f32.gmra.mxu0 %v745
        %v813 = vpop.f32.mrf.mxu0
        %v814 = vadd.f32 0.0, %v813
        %v815 = vpop.f32.mrf.mxu0
        %816 = vdwg.mxu0
        %v817 = vadd.f32 %v661, %v814
        %826 = vrot.lane.b32.xlu0 %v651, 112
        %v827 = vpop.permute.xlu0 %826
        %828 = vrot.lane.b32.xlu0 %v652, 112
        %v829 = vpop.permute.xlu0 %828
        %830 = vrot.lane.b32.xlu0 %v653, 112
        %v831 = vpop.permute.xlu0 %830
        %832 = vrot.lane.b32.xlu0 %v654, 112
        %v833 = vpop.permute.xlu0 %832
        %834 = vrot.lane.b32.xlu0 %v655, 112
        %v835 = vpop.permute.xlu0 %834
        %836 = vrot.lane.b32.xlu0 %v656, 112
        %v837 = vpop.permute.xlu0 %836
        %838 = vrot.lane.b32.xlu0 %v657, 112
        %v839 = vpop.permute.xlu0 %838
        %840 = vrot.lane.b32.xlu0 %v658, 112
        %v841 = vpop.permute.xlu0 %840
        %v850 = vsel %vm663, %v827, 0.0
        %851 = vadd.xlane.f32.xlu0 %v850
        %v852 = vpop.xlane.xlu0 %851
        %v853 = vsel %vm663, %v829, 0.0
        %854 = vadd.xlane.f32.xlu0 %v853
        %v855 = vpop.xlane.xlu0 %854
        %v856 = vsel %vm663, %v831, 0.0
        %857 = vadd.xlane.f32.xlu0 %v856
        %v858 = vpop.xlane.xlu0 %857
        %v859 = vsel %vm663, %v833, 0.0
        %860 = vadd.xlane.f32.xlu0 %v859
        %v861 = vpop.xlane.xlu0 %860
        %v862 = vsel %vm663, %v835, 0.0
        %863 = vadd.xlane.f32.xlu0 %v862
        %v864 = vpop.xlane.xlu0 %863
        %v865 = vsel %vm663, %v837, 0.0
        %866 = vadd.xlane.f32.xlu0 %v865
        %v867 = vpop.xlane.xlu0 %866
        %v868 = vsel %vm663, %v839, 0.0
        %869 = vadd.xlane.f32.xlu0 %v868
        %v870 = vpop.xlane.xlu0 %869
        %v871 = vsel %vm663, %v841, 0.0
        %872 = vadd.xlane.f32.xlu0 %v871
        %v873 = vpop.xlane.xlu0 %872
        %v874 = vmul.f32 %v852, %v688
        %v875 = vmul.f32 %v855, %v688
        %v876 = vmul.f32 %v858, %v688
        %v877 = vmul.f32 %v861, %v688
        %v878 = vmul.f32 %v864, %v688
        %v879 = vmul.f32 %v867, %v688
        %v880 = vmul.f32 %v870, %v688
        %v881 = vmul.f32 %v873, %v688
        %882 = vrot.lane.b32.xlu0 %v241, 120
        %v883 = vpop.permute.xlu0 %882
        %v892 = vlaneseq
        %v893 = vshrl.u32 %v892, 7
        %v894 = vsub.s32 %v293, %v893
        %v895 = vrot.slane %v874, %v894
        %v896 = vlaneseq
        %v897 = vshrl.u32 %v896, 7
        %v898 = vsub.s32 %v293, %v897
        %v899 = vrot.slane %v875, %v898
        %v900 = vlaneseq
        %v901 = vshrl.u32 %v900, 7
        %v902 = vsub.s32 %v293, %v901
        %v903 = vrot.slane %v876, %v902
        %v904 = vlaneseq
        %v905 = vshrl.u32 %v904, 7
        %v906 = vsub.s32 %v293, %v905
        %v907 = vrot.slane %v877, %v906
        %v908 = vlaneseq
        %v909 = vshrl.u32 %v908, 7
        %v910 = vsub.s32 %v293, %v909
        %v911 = vrot.slane %v878, %v910
        %v912 = vlaneseq
        %v913 = vshrl.u32 %v912, 7
        %v914 = vsub.s32 %v293, %v913
        %v915 = vrot.slane %v879, %v914
        %v916 = vlaneseq
        %v917 = vshrl.u32 %v916, 7
        %v918 = vsub.s32 %v293, %v917
        %v919 = vrot.slane %v880, %v918
        %v920 = vlaneseq
        %v921 = vshrl.u32 %v920, 7
        %v922 = vsub.s32 %v293, %v921
        %v923 = vrot.slane %v881, %v922
        %v924 = vsel %vm326, %v899, %v895
        %v925 = vsel %vm328, %v903, %v924
        %v926 = vsel %vm330, %v907, %v925
        %v927 = vsel %vm332, %v911, %v926
        %v928 = vsel %vm334, %v915, %v927
        %v929 = vsel %vm336, %v919, %v928
        %v930 = vsel %vm338, %v923, %v929
        %v932 = vsel %vm354, %v883, 0
        %934 = vmatprep.subr.mxu0 0.0
        %935 = vmatpush1.msra.mxu0 0.0
        %936 = vmatprep.subr.mxu0 0.0
        %937 = vmatpush1.msra.mxu0 0.0
        %938 = vmatprep.subr.mxu0 0.0
        %939 = vmatpush1.msra.mxu0 0.0
        %940 = vmatprep.subr.mxu0 0.0
        %941 = vmatpush1.msra.mxu0 0.0
        %942 = vmatprep.subr.mxu0 0.0
        %943 = vmatpush1.msra.mxu0 0.0
        %944 = vmatprep.subr.mxu0 0.0
        %945 = vmatpush1.msra.mxu0 0.0
        %946 = vmatprep.subr.mxu0 0.0
        %947 = vmatpush1.msra.mxu0 0.0
        %948 = vmatprep.subr.mxu0 0.0
        %949 = vmatpush1.msra.mxu0 0.0
        %950 = vmatprep.subr.mxu0 0.0
        %951 = vmatpush1.msra.mxu0 0.0
        %952 = vmatprep.subr.mxu0 0.0
        %953 = vmatpush1.msra.mxu0 0.0
        %954 = vmatprep.subr.mxu0 0.0
        %955 = vmatpush1.msra.mxu0 0.0
        %956 = vmatprep.subr.mxu0 0.0
        %957 = vmatpush1.msra.mxu0 0.0
        %958 = vmatprep.subr.mxu0 0.0
        %959 = vmatpush1.msra.mxu0 0.0
        %960 = vmatprep.subr.mxu0 0.0
        %961 = vmatpush1.msra.mxu0 0.0
        %962 = vmatprep.subr.mxu0 0.0
        %963 = vmatpush1.msra.mxu0 0.0
        %964 = vmatprep.subr.mxu0 0.0
        %965 = vmatpush1.msra.mxu0 %v930
        %966 = vmatprep.subr.mxu0 0.0
        %967 = vmatpush2.msra.mxu0 0.0
        %968 = vmatprep.subr.mxu0 0.0
        %969 = vmatpush2.msra.mxu0 0.0
        %970 = vmatprep.subr.mxu0 0.0
        %971 = vmatpush2.msra.mxu0 0.0
        %972 = vmatprep.subr.mxu0 0.0
        %973 = vmatpush2.msra.mxu0 0.0
        %974 = vmatprep.subr.mxu0 0.0
        %975 = vmatpush2.msra.mxu0 0.0
        %976 = vmatprep.subr.mxu0 0.0
        %977 = vmatpush2.msra.mxu0 0.0
        %978 = vmatprep.subr.mxu0 0.0
        %979 = vmatpush2.msra.mxu0 0.0
        %980 = vmatprep.subr.mxu0 0.0
        %981 = vmatpush2.msra.mxu0 0.0
        %982 = vmatprep.subr.mxu0 0.0
        %983 = vmatpush2.msra.mxu0 0.0
        %984 = vmatprep.subr.mxu0 0.0
        %985 = vmatpush2.msra.mxu0 0.0
        %986 = vmatprep.subr.mxu0 0.0
        %987 = vmatpush2.msra.mxu0 0.0
        %988 = vmatprep.subr.mxu0 0.0
        %989 = vmatpush2.msra.mxu0 0.0
        %990 = vmatprep.subr.mxu0 0.0
        %991 = vmatpush2.msra.mxu0 0.0
        %992 = vmatprep.subr.mxu0 0.0
        %993 = vmatpush2.msra.mxu0 0.0
        %994 = vmatprep.subr.mxu0 0.0
        %995 = vmatpush2.msra.mxu0 0.0
        %996 = vmatprep.subr.mxu0 0.0
        %997 = vmatpush2.msra.mxu0 0.0
        %998 = vmatprep.mubr.f32.mxu0 0.0
        %999 = vmatmul.mubr.f32.gmra.mxu0 %v932
        %v1000 = vpop.f32.mrf.mxu0
        %v1001 = vadd.f32 0.0, %v1000
        %v1002 = vpop.f32.mrf.mxu0
        %1003 = vdwg.mxu0
        %v1004 = vadd.f32 %v817, %v1001
        %1005 = vrot.lane.b32.xlu0 %v651, 96
        %v1006 = vpop.permute.xlu0 %1005
        %1007 = vrot.lane.b32.xlu0 %v652, 96
        %v1008 = vpop.permute.xlu0 %1007
        %1009 = vrot.lane.b32.xlu0 %v653, 96
        %v1010 = vpop.permute.xlu0 %1009
        %1011 = vrot.lane.b32.xlu0 %v654, 96
        %v1012 = vpop.permute.xlu0 %1011
        %1013 = vrot.lane.b32.xlu0 %v655, 96
        %v1014 = vpop.permute.xlu0 %1013
        %1015 = vrot.lane.b32.xlu0 %v656, 96
        %v1016 = vpop.permute.xlu0 %1015
        %1017 = vrot.lane.b32.xlu0 %v657, 96
        %v1018 = vpop.permute.xlu0 %1017
        %1019 = vrot.lane.b32.xlu0 %v658, 96
        %v1020 = vpop.permute.xlu0 %1019
        %v1029 = vsel %vm663, %v1006, 0.0
        %1030 = vadd.xlane.f32.xlu0 %v1029
        %v1031 = vpop.xlane.xlu0 %1030
        %v1032 = vsel %vm663, %v1008, 0.0
        %1033 = vadd.xlane.f32.xlu0 %v1032
        %v1034 = vpop.xlane.xlu0 %1033
        %v1035 = vsel %vm663, %v1010, 0.0
        %1036 = vadd.xlane.f32.xlu0 %v1035
        %v1037 = vpop.xlane.xlu0 %1036
        %v1038 = vsel %vm663, %v1012, 0.0
        %1039 = vadd.xlane.f32.xlu0 %v1038
        %v1040 = vpop.xlane.xlu0 %1039
        %v1041 = vsel %vm663, %v1014, 0.0
        %1042 = vadd.xlane.f32.xlu0 %v1041
        %v1043 = vpop.xlane.xlu0 %1042
        %v1044 = vsel %vm663, %v1016, 0.0
        %1045 = vadd.xlane.f32.xlu0 %v1044
        %v1046 = vpop.xlane.xlu0 %1045
        %v1047 = vsel %vm663, %v1018, 0.0
        %1048 = vadd.xlane.f32.xlu0 %v1047
        %v1049 = vpop.xlane.xlu0 %1048
        %v1050 = vsel %vm663, %v1020, 0.0
        %1051 = vadd.xlane.f32.xlu0 %v1050
        %v1052 = vpop.xlane.xlu0 %1051
        %v1053 = vmul.f32 %v1031, %v688
        %v1054 = vmul.f32 %v1034, %v688
        %v1055 = vmul.f32 %v1037, %v688
        %v1056 = vmul.f32 %v1040, %v688
        %v1057 = vmul.f32 %v1043, %v688
        %v1058 = vmul.f32 %v1046, %v688
        %v1059 = vmul.f32 %v1049, %v688
        %v1060 = vmul.f32 %v1052, %v688
        %1061 = vrot.lane.b32.xlu0 %v241, 112
        %v1062 = vpop.permute.xlu0 %1061
        %v1071 = vlaneseq
        %v1072 = vshrl.u32 %v1071, 7
        %v1073 = vsub.s32 %v293, %v1072
        %v1074 = vrot.slane %v1053, %v1073
        %v1075 = vlaneseq
        %v1076 = vshrl.u32 %v1075, 7
        %v1077 = vsub.s32 %v293, %v1076
        %v1078 = vrot.slane %v1054, %v1077
        %v1079 = vlaneseq
        %v1080 = vshrl.u32 %v1079, 7
        %v1081 = vsub.s32 %v293, %v1080
        %v1082 = vrot.slane %v1055, %v1081
        %v1083 = vlaneseq
        %v1084 = vshrl.u32 %v1083, 7
        %v1085 = vsub.s32 %v293, %v1084
        %v1086 = vrot.slane %v1056, %v1085
        %v1087 = vlaneseq
        %v1088 = vshrl.u32 %v1087, 7
        %v1089 = vsub.s32 %v293, %v1088
        %v1090 = vrot.slane %v1057, %v1089
        %v1091 = vlaneseq
        %v1092 = vshrl.u32 %v1091, 7
        %v1093 = vsub.s32 %v293, %v1092
        %v1094 = vrot.slane %v1058, %v1093
        %v1095 = vlaneseq
        %v1096 = vshrl.u32 %v1095, 7
        %v1097 = vsub.s32 %v293, %v1096
        %v1098 = vrot.slane %v1059, %v1097
        %v1099 = vlaneseq
        %v1100 = vshrl.u32 %v1099, 7
        %v1101 = vsub.s32 %v293, %v1100
        %v1102 = vrot.slane %v1060, %v1101
        %v1103 = vsel %vm326, %v1078, %v1074
        %v1104 = vsel %vm328, %v1082, %v1103
        %v1105 = vsel %vm330, %v1086, %v1104
        %v1106 = vsel %vm332, %v1090, %v1105
        %v1107 = vsel %vm334, %v1094, %v1106
        %v1108 = vsel %vm336, %v1098, %v1107
        %v1109 = vsel %vm338, %v1102, %v1108
        %v1111 = vsel %vm354, %v1062, 0
        %1113 = vmatprep.subr.mxu0 0.0
        %1114 = vmatpush1.msra.mxu0 0.0
        %1115 = vmatprep.subr.mxu0 0.0
        %1116 = vmatpush1.msra.mxu0 0.0
        %1117 = vmatprep.subr.mxu0 0.0
        %1118 = vmatpush1.msra.mxu0 0.0
        %1119 = vmatprep.subr.mxu0 0.0
        %1120 = vmatpush1.msra.mxu0 0.0
        %1121 = vmatprep.subr.mxu0 0.0
        %1122 = vmatpush1.msra.mxu0 0.0
        %1123 = vmatprep.subr.mxu0 0.0
        %1124 = vmatpush1.msra.mxu0 0.0
        %1125 = vmatprep.subr.mxu0 0.0
        %1126 = vmatpush1.msra.mxu0 0.0
        %1127 = vmatprep.subr.mxu0 0.0
        %1128 = vmatpush1.msra.mxu0 0.0
        %1129 = vmatprep.subr.mxu0 0.0
        %1130 = vmatpush1.msra.mxu0 0.0
        %1131 = vmatprep.subr.mxu0 0.0
        %1132 = vmatpush1.msra.mxu0 0.0
        %1133 = vmatprep.subr.mxu0 0.0
        %1134 = vmatpush1.msra.mxu0 0.0
        %1135 = vmatprep.subr.mxu0 0.0
        %1136 = vmatpush1.msra.mxu0 0.0
        %1137 = vmatprep.subr.mxu0 0.0
        %1138 = vmatpush1.msra.mxu0 0.0
        %1139 = vmatprep.subr.mxu0 0.0
        %1140 = vmatpush1.msra.mxu0 0.0
        %1141 = vmatprep.subr.mxu0 0.0
        %1142 = vmatpush1.msra.mxu0 0.0
        %1143 = vmatprep.subr.mxu0 0.0
        %1144 = vmatpush1.msra.mxu0 %v1109
        %1145 = vmatprep.subr.mxu0 0.0
        %1146 = vmatpush2.msra.mxu0 0.0
        %1147 = vmatprep.subr.mxu0 0.0
        %1148 = vmatpush2.msra.mxu0 0.0
        %1149 = vmatprep.subr.mxu0 0.0
        %1150 = vmatpush2.msra.mxu0 0.0
        %1151 = vmatprep.subr.mxu0 0.0
        %1152 = vmatpush2.msra.mxu0 0.0
        %1153 = vmatprep.subr.mxu0 0.0
        %1154 = vmatpush2.msra.mxu0 0.0
        %1155 = vmatprep.subr.mxu0 0.0
        %1156 = vmatpush2.msra.mxu0 0.0
        %1157 = vmatprep.subr.mxu0 0.0
        %1158 = vmatpush2.msra.mxu0 0.0
        %1159 = vmatprep.subr.mxu0 0.0
        %1160 = vmatpush2.msra.mxu0 0.0
        %1161 = vmatprep.subr.mxu0 0.0
        %1162 = vmatpush2.msra.mxu0 0.0
        %1163 = vmatprep.subr.mxu0 0.0
        %1164 = vmatpush2.msra.mxu0 0.0
        %1165 = vmatprep.subr.mxu0 0.0
        %1166 = vmatpush2.msra.mxu0 0.0
        %1167 = vmatprep.subr.mxu0 0.0
        %1168 = vmatpush2.msra.mxu0 0.0
        %1169 = vmatprep.subr.mxu0 0.0
        %1170 = vmatpush2.msra.mxu0 0.0
        %1171 = vmatprep.subr.mxu0 0.0
        %1172 = vmatpush2.msra.mxu0 0.0
        %1173 = vmatprep.subr.mxu0 0.0
        %1174 = vmatpush2.msra.mxu0 0.0
        %1175 = vmatprep.subr.mxu0 0.0
        %1176 = vmatpush2.msra.mxu0 0.0
        %1177 = vmatprep.mubr.f32.mxu0 0.0
        %1178 = vmatmul.mubr.f32.gmra.mxu0 %v1111
        %v1179 = vpop.f32.mrf.mxu0
        %v1180 = vadd.f32 0.0, %v1179
        %v1181 = vpop.f32.mrf.mxu0
        %1182 = vdwg.mxu0
        %v1183 = vadd.f32 %v1004, %v1180
        %1184 = vrot.lane.b32.xlu0 %v651, 80
        %v1185 = vpop.permute.xlu0 %1184
        %1186 = vrot.lane.b32.xlu0 %v652, 80
        %v1187 = vpop.permute.xlu0 %1186
        %1188 = vrot.lane.b32.xlu0 %v653, 80
        %v1189 = vpop.permute.xlu0 %1188
        %1190 = vrot.lane.b32.xlu0 %v654, 80
        %v1191 = vpop.permute.xlu0 %1190
        %1192 = vrot.lane.b32.xlu0 %v655, 80
        %v1193 = vpop.permute.xlu0 %1192
        %1194 = vrot.lane.b32.xlu0 %v656, 80
        %v1195 = vpop.permute.xlu0 %1194
        %1196 = vrot.lane.b32.xlu0 %v657, 80
        %v1197 = vpop.permute.xlu0 %1196
        %1198 = vrot.lane.b32.xlu0 %v658, 80
        %v1199 = vpop.permute.xlu0 %1198
        %v1208 = vsel %vm663, %v1185, 0.0
        %1209 = vadd.xlane.f32.xlu0 %v1208
        %v1210 = vpop.xlane.xlu0 %1209
        %v1211 = vsel %vm663, %v1187, 0.0
        %1212 = vadd.xlane.f32.xlu0 %v1211
        %v1213 = vpop.xlane.xlu0 %1212
        %v1214 = vsel %vm663, %v1189, 0.0
        %1215 = vadd.xlane.f32.xlu0 %v1214
        %v1216 = vpop.xlane.xlu0 %1215
        %v1217 = vsel %vm663, %v1191, 0.0
        %1218 = vadd.xlane.f32.xlu0 %v1217
        %v1219 = vpop.xlane.xlu0 %1218
        %v1220 = vsel %vm663, %v1193, 0.0
        %1221 = vadd.xlane.f32.xlu0 %v1220
        %v1222 = vpop.xlane.xlu0 %1221
        %v1223 = vsel %vm663, %v1195, 0.0
        %1224 = vadd.xlane.f32.xlu0 %v1223
        %v1225 = vpop.xlane.xlu0 %1224
        %v1226 = vsel %vm663, %v1197, 0.0
        %1227 = vadd.xlane.f32.xlu0 %v1226
        %v1228 = vpop.xlane.xlu0 %1227
        %v1229 = vsel %vm663, %v1199, 0.0
        %1230 = vadd.xlane.f32.xlu0 %v1229
        %v1231 = vpop.xlane.xlu0 %1230
        %v1232 = vmul.f32 %v1210, %v688
        %v1233 = vmul.f32 %v1213, %v688
        %v1234 = vmul.f32 %v1216, %v688
        %v1235 = vmul.f32 %v1219, %v688
        %v1236 = vmul.f32 %v1222, %v688
        %v1237 = vmul.f32 %v1225, %v688
        %v1238 = vmul.f32 %v1228, %v688
        %v1239 = vmul.f32 %v1231, %v688
        %1240 = vrot.lane.b32.xlu0 %v241, 104
        %v1241 = vpop.permute.xlu0 %1240
        %v1250 = vlaneseq
        %v1251 = vshrl.u32 %v1250, 7
        %v1252 = vsub.s32 %v293, %v1251
        %v1253 = vrot.slane %v1232, %v1252
        %v1254 = vlaneseq
        %v1255 = vshrl.u32 %v1254, 7
        %v1256 = vsub.s32 %v293, %v1255
        %v1257 = vrot.slane %v1233, %v1256
        %v1258 = vlaneseq
        %v1259 = vshrl.u32 %v1258, 7
        %v1260 = vsub.s32 %v293, %v1259
        %v1261 = vrot.slane %v1234, %v1260
        %v1262 = vlaneseq
        %v1263 = vshrl.u32 %v1262, 7
        %v1264 = vsub.s32 %v293, %v1263
        %v1265 = vrot.slane %v1235, %v1264
        %v1266 = vlaneseq
        %v1267 = vshrl.u32 %v1266, 7
        %v1268 = vsub.s32 %v293, %v1267
        %v1269 = vrot.slane %v1236, %v1268
        %v1270 = vlaneseq
        %v1271 = vshrl.u32 %v1270, 7
        %v1272 = vsub.s32 %v293, %v1271
        %v1273 = vrot.slane %v1237, %v1272
        %v1274 = vlaneseq
        %v1275 = vshrl.u32 %v1274, 7
        %v1276 = vsub.s32 %v293, %v1275
        %v1277 = vrot.slane %v1238, %v1276
        %v1278 = vlaneseq
        %v1279 = vshrl.u32 %v1278, 7
        %v1280 = vsub.s32 %v293, %v1279
        %v1281 = vrot.slane %v1239, %v1280
        %v1282 = vsel %vm326, %v1257, %v1253
        %v1283 = vsel %vm328, %v1261, %v1282
        %v1284 = vsel %vm330, %v1265, %v1283
        %v1285 = vsel %vm332, %v1269, %v1284
        %v1286 = vsel %vm334, %v1273, %v1285
        %v1287 = vsel %vm336, %v1277, %v1286
        %v1288 = vsel %vm338, %v1281, %v1287
        %v1290 = vsel %vm354, %v1241, 0
        %1292 = vmatprep.subr.mxu0 0.0
        %1293 = vmatpush1.msra.mxu0 0.0
        %1294 = vmatprep.subr.mxu0 0.0
        %1295 = vmatpush1.msra.mxu0 0.0
        %1296 = vmatprep.subr.mxu0 0.0
        %1297 = vmatpush1.msra.mxu0 0.0
        %1298 = vmatprep.subr.mxu0 0.0
        %1299 = vmatpush1.msra.mxu0 0.0
        %1300 = vmatprep.subr.mxu0 0.0
        %1301 = vmatpush1.msra.mxu0 0.0
        %1302 = vmatprep.subr.mxu0 0.0
        %1303 = vmatpush1.msra.mxu0 0.0
        %1304 = vmatprep.subr.mxu0 0.0
        %1305 = vmatpush1.msra.mxu0 0.0
        %1306 = vmatprep.subr.mxu0 0.0
        %1307 = vmatpush1.msra.mxu0 0.0
        %1308 = vmatprep.subr.mxu0 0.0
        %1309 = vmatpush1.msra.mxu0 0.0
        %1310 = vmatprep.subr.mxu0 0.0
        %1311 = vmatpush1.msra.mxu0 0.0
        %1312 = vmatprep.subr.mxu0 0.0
        %1313 = vmatpush1.msra.mxu0 0.0
        %1314 = vmatprep.subr.mxu0 0.0
        %1315 = vmatpush1.msra.mxu0 0.0
        %1316 = vmatprep.subr.mxu0 0.0
        %1317 = vmatpush1.msra.mxu0 0.0
        %1318 = vmatprep.subr.mxu0 0.0
        %1319 = vmatpush1.msra.mxu0 0.0
        %1320 = vmatprep.subr.mxu0 0.0
        %1321 = vmatpush1.msra.mxu0 0.0
        %1322 = vmatprep.subr.mxu0 0.0
        %1323 = vmatpush1.msra.mxu0 %v1288
        %1324 = vmatprep.subr.mxu0 0.0
        %1325 = vmatpush2.msra.mxu0 0.0
        %1326 = vmatprep.subr.mxu0 0.0
        %1327 = vmatpush2.msra.mxu0 0.0
        %1328 = vmatprep.subr.mxu0 0.0
        %1329 = vmatpush2.msra.mxu0 0.0
        %1330 = vmatprep.subr.mxu0 0.0
        %1331 = vmatpush2.msra.mxu0 0.0
        %1332 = vmatprep.subr.mxu0 0.0
        %1333 = vmatpush2.msra.mxu0 0.0
        %1334 = vmatprep.subr.mxu0 0.0
        %1335 = vmatpush2.msra.mxu0 0.0
        %1336 = vmatprep.subr.mxu0 0.0
        %1337 = vmatpush2.msra.mxu0 0.0
        %1338 = vmatprep.subr.mxu0 0.0
        %1339 = vmatpush2.msra.mxu0 0.0
        %1340 = vmatprep.subr.mxu0 0.0
        %1341 = vmatpush2.msra.mxu0 0.0
        %1342 = vmatprep.subr.mxu0 0.0
        %1343 = vmatpush2.msra.mxu0 0.0
        %1344 = vmatprep.subr.mxu0 0.0
        %1345 = vmatpush2.msra.mxu0 0.0
        %1346 = vmatprep.subr.mxu0 0.0
        %1347 = vmatpush2.msra.mxu0 0.0
        %1348 = vmatprep.subr.mxu0 0.0
        %1349 = vmatpush2.msra.mxu0 0.0
        %1350 = vmatprep.subr.mxu0 0.0
        %1351 = vmatpush2.msra.mxu0 0.0
        %1352 = vmatprep.subr.mxu0 0.0
        %1353 = vmatpush2.msra.mxu0 0.0
        %1354 = vmatprep.subr.mxu0 0.0
        %1355 = vmatpush2.msra.mxu0 0.0
        %1356 = vmatprep.mubr.f32.mxu0 0.0
        %1357 = vmatmul.mubr.f32.gmra.mxu0 %v1290
        %v1358 = vpop.f32.mrf.mxu0
        %v1359 = vadd.f32 0.0, %v1358
        %v1360 = vpop.f32.mrf.mxu0
        %1361 = vdwg.mxu0
        %v1362 = vadd.f32 %v1183, %v1359
        %1363 = vset.pattern.permute.xlu0 67
        %1364 = vperm.xlu0 %1363, %v241
        %v1365 = vpop.permute.xlu0 %1364
        %1367 = vrot.lane.b32.xlu0 %v241, 80
        %v1368 = vpop.permute.xlu0 %1367
        %v1369 = vsel %vm354, %v1368, 0
        %1371 = vmatprep.subr.mxu0 0.0
        %1372 = vmatpush1.msra.mxu0 0.0
        %1373 = vmatprep.subr.mxu0 0.0
        %1374 = vmatpush1.msra.mxu0 0.0
        %1375 = vmatprep.subr.mxu0 0.0
        %1376 = vmatpush1.msra.mxu0 0.0
        %1377 = vmatprep.subr.mxu0 0.0
        %1378 = vmatpush1.msra.mxu0 0.0
        %1379 = vmatprep.subr.mxu0 0.0
        %1380 = vmatpush1.msra.mxu0 0.0
        %1381 = vmatprep.subr.mxu0 0.0
        %1382 = vmatpush1.msra.mxu0 0.0
        %1383 = vmatprep.subr.mxu0 0.0
        %1384 = vmatpush1.msra.mxu0 0.0
        %1385 = vmatprep.subr.mxu0 0.0
        %1386 = vmatpush1.msra.mxu0 0.0
        %1387 = vmatprep.subr.mxu0 0.0
        %1388 = vmatpush1.msra.mxu0 0.0
        %1389 = vmatprep.subr.mxu0 0.0
        %1390 = vmatpush1.msra.mxu0 0.0
        %1391 = vmatprep.subr.mxu0 0.0
        %1392 = vmatpush1.msra.mxu0 0.0
        %1393 = vmatprep.subr.mxu0 0.0
        %1394 = vmatpush1.msra.mxu0 0.0
        %1395 = vmatprep.subr.mxu0 0.0
        %1396 = vmatpush1.msra.mxu0 0.0
        %1397 = vmatprep.subr.mxu0 0.0
        %1398 = vmatpush1.msra.mxu0 0.0
        %1399 = vmatprep.subr.mxu0 0.0
        %1400 = vmatpush1.msra.mxu0 0.0
        %1401 = vmatprep.subr.mxu0 0.0
        %1402 = vmatpush1.msra.mxu0 %v1362
        %1403 = vmatprep.subr.mxu0 0.0
        %1404 = vmatpush2.msra.mxu0 0.0
        %1405 = vmatprep.subr.mxu0 0.0
        %1406 = vmatpush2.msra.mxu0 0.0
        %1407 = vmatprep.subr.mxu0 0.0
        %1408 = vmatpush2.msra.mxu0 0.0
        %1409 = vmatprep.subr.mxu0 0.0
        %1410 = vmatpush2.msra.mxu0 0.0
        %1411 = vmatprep.subr.mxu0 0.0
        %1412 = vmatpush2.msra.mxu0 0.0
        %1413 = vmatprep.subr.mxu0 0.0
        %1414 = vmatpush2.msra.mxu0 0.0
        %1415 = vmatprep.subr.mxu0 0.0
        %1416 = vmatpush2.msra.mxu0 0.0
        %1417 = vmatprep.subr.mxu0 0.0
        %1418 = vmatpush2.msra.mxu0 0.0
        %1419 = vmatprep.subr.mxu0 0.0
        %1420 = vmatpush2.msra.mxu0 0.0
        %1421 = vmatprep.subr.mxu0 0.0
        %1422 = vmatpush2.msra.mxu0 0.0
        %1423 = vmatprep.subr.mxu0 0.0
        %1424 = vmatpush2.msra.mxu0 0.0
        %1425 = vmatprep.subr.mxu0 0.0
        %1426 = vmatpush2.msra.mxu0 0.0
        %1427 = vmatprep.subr.mxu0 0.0
        %1428 = vmatpush2.msra.mxu0 0.0
        %1429 = vmatprep.subr.mxu0 0.0
        %1430 = vmatpush2.msra.mxu0 0.0
        %1431 = vmatprep.subr.mxu0 0.0
        %1432 = vmatpush2.msra.mxu0 0.0
        %1433 = vmatprep.subr.mxu0 0.0
        %1434 = vmatpush2.msra.mxu0 0.0
        %1435 = vmatprep.mubr.f32.mxu0 0.0
        %1436 = vmatmul.mubr.f32.gmra.mxu0 %v1369
        %v1437 = vpop.f32.mrf.mxu0
        %v1438 = vadd.f32 %v1365, %v1437
        %v1439 = vpop.f32.mrf.mxu0
        %1440 = vdwg.mxu0
        %v1441 = vmax.f32 %v1438, 0.0
        %1442 = vrot.lane.b32.xlu0 %v241, 68
        %v1443 = vpop.permute.xlu0 %1442
        %v1444 = vsel %vm341, %v1443, 0
        %vm1446 = vcmask 1043456
        %v1448 = vsel %vm1446, %v1441, 0
        %1450 = vmatprep.subr.mxu0 0.0
        %1451 = vmatpush1.msra.mxu0 0.0
        %1452 = vmatprep.subr.mxu0 0.0
        %1453 = vmatpush1.msra.mxu0 0.0
        %1454 = vmatprep.subr.mxu0 0.0
        %1455 = vmatpush1.msra.mxu0 0.0
        %1456 = vmatprep.subr.mxu0 0.0
        %1457 = vmatpush1.msra.mxu0 0.0
        %1458 = vmatprep.subr.mxu0 0.0
        %1459 = vmatpush1.msra.mxu0 0.0
        %1460 = vmatprep.subr.mxu0 0.0
        %1461 = vmatpush1.msra.mxu0 0.0
        %1462 = vmatprep.subr.mxu0 0.0
        %1463 = vmatpush1.msra.mxu0 0.0
        %1464 = vmatprep.subr.mxu0 0.0
        %1465 = vmatpush1.msra.mxu0 0.0
        %1466 = vmatprep.subr.mxu0 0.0
        %1467 = vmatpush1.msra.mxu0 0.0
        %1468 = vmatprep.subr.mxu0 0.0
        %1469 = vmatpush1.msra.mxu0 0.0
        %1470 = vmatprep.subr.mxu0 0.0
        %1471 = vmatpush1.msra.mxu0 0.0
        %1472 = vmatprep.subr.mxu0 0.0
        %1473 = vmatpush1.msra.mxu0 0.0
        %1474 = vmatprep.subr.mxu0 0.0
        %1475 = vmatpush1.msra.mxu0 0.0
        %1476 = vmatprep.subr.mxu0 0.0
        %1477 = vmatpush1.msra.mxu0 0.0
        %1478 = vmatprep.subr.mxu0 0.0
        %1479 = vmatpush1.msra.mxu0 0.0
        %1480 = vmatprep.subr.mxu0 0.0
        %1481 = vmatpush1.msra.mxu0 %v1448
        %1482 = vmatprep.subr.mxu0 0.0
        %1483 = vmatpush2.msra.mxu0 0.0
        %1484 = vmatprep.subr.mxu0 0.0
        %1485 = vmatpush2.msra.mxu0 0.0
        %1486 = vmatprep.subr.mxu0 0.0
        %1487 = vmatpush2.msra.mxu0 0.0
        %1488 = vmatprep.subr.mxu0 0.0
        %1489 = vmatpush2.msra.mxu0 0.0
        %1490 = vmatprep.subr.mxu0 0.0
        %1491 = vmatpush2.msra.mxu0 0.0
        %1492 = vmatprep.subr.mxu0 0.0
        %1493 = vmatpush2.msra.mxu0 0.0
        %1494 = vmatprep.subr.mxu0 0.0
        %1495 = vmatpush2.msra.mxu0 0.0
        %1496 = vmatprep.subr.mxu0 0.0
        %1497 = vmatpush2.msra.mxu0 0.0
        %1498 = vmatprep.subr.mxu0 0.0
        %1499 = vmatpush2.msra.mxu0 0.0
        %1500 = vmatprep.subr.mxu0 0.0
        %1501 = vmatpush2.msra.mxu0 0.0
        %1502 = vmatprep.subr.mxu0 0.0
        %1503 = vmatpush2.msra.mxu0 0.0
        %1504 = vmatprep.subr.mxu0 0.0
        %1505 = vmatpush2.msra.mxu0 0.0
        %1506 = vmatprep.subr.mxu0 0.0
        %1507 = vmatpush2.msra.mxu0 0.0
        %1508 = vmatprep.subr.mxu0 0.0
        %1509 = vmatpush2.msra.mxu0 0.0
        %1510 = vmatprep.subr.mxu0 0.0
        %1511 = vmatpush2.msra.mxu0 0.0
        %1512 = vmatprep.subr.mxu0 0.0
        %1513 = vmatpush2.msra.mxu0 0.0
        %1514 = vmatprep.mubr.f32.mxu0 0.0
        %1515 = vmatmul.mubr.f32.gmra.mxu0 %v1444
        %v1516 = vpop.f32.mrf.mxu0
        %v1517 = vadd.f32 0.0, %v1516
        %v1518 = vpop.f32.mrf.mxu0
        %1519 = vdwg.mxu0
        %1520 = vrot.lane.b32.xlu0 %v241, 72
        %v1521 = vpop.permute.xlu0 %1520
        %v1522 = vsel %vm341, %v1521, 0
        %v1525 = vsel %vm1446, %v650, 0
        %1527 = vmatprep.subr.mxu0 0.0
        %1528 = vmatpush1.msra.mxu0 0.0
        %1529 = vmatprep.subr.mxu0 0.0
        %1530 = vmatpush1.msra.mxu0 0.0
        %1531 = vmatprep.subr.mxu0 0.0
        %1532 = vmatpush1.msra.mxu0 0.0
        %1533 = vmatprep.subr.mxu0 0.0
        %1534 = vmatpush1.msra.mxu0 0.0
        %1535 = vmatprep.subr.mxu0 0.0
        %1536 = vmatpush1.msra.mxu0 0.0
        %1537 = vmatprep.subr.mxu0 0.0
        %1538 = vmatpush1.msra.mxu0 0.0
        %1539 = vmatprep.subr.mxu0 0.0
        %1540 = vmatpush1.msra.mxu0 0.0
        %1541 = vmatprep.subr.mxu0 0.0
        %1542 = vmatpush1.msra.mxu0 0.0
        %1543 = vmatprep.subr.mxu0 0.0
        %1544 = vmatpush1.msra.mxu0 0.0
        %1545 = vmatprep.subr.mxu0 0.0
        %1546 = vmatpush1.msra.mxu0 0.0
        %1547 = vmatprep.subr.mxu0 0.0
        %1548 = vmatpush1.msra.mxu0 0.0
        %1549 = vmatprep.subr.mxu0 0.0
        %1550 = vmatpush1.msra.mxu0 0.0
        %1551 = vmatprep.subr.mxu0 0.0
        %1552 = vmatpush1.msra.mxu0 0.0
        %1553 = vmatprep.subr.mxu0 0.0
        %1554 = vmatpush1.msra.mxu0 0.0
        %1555 = vmatprep.subr.mxu0 0.0
        %1556 = vmatpush1.msra.mxu0 0.0
        %1557 = vmatprep.subr.mxu0 0.0
        %1558 = vmatpush1.msra.mxu0 %v1525
        %1559 = vmatprep.subr.mxu0 0.0
        %1560 = vmatpush2.msra.mxu0 0.0
        %1561 = vmatprep.subr.mxu0 0.0
        %1562 = vmatpush2.msra.mxu0 0.0
        %1563 = vmatprep.subr.mxu0 0.0
        %1564 = vmatpush2.msra.mxu0 0.0
        %1565 = vmatprep.subr.mxu0 0.0
        %1566 = vmatpush2.msra.mxu0 0.0
        %1567 = vmatprep.subr.mxu0 0.0
        %1568 = vmatpush2.msra.mxu0 0.0
        %1569 = vmatprep.subr.mxu0 0.0
        %1570 = vmatpush2.msra.mxu0 0.0
        %1571 = vmatprep.subr.mxu0 0.0
        %1572 = vmatpush2.msra.mxu0 0.0
        %1573 = vmatprep.subr.mxu0 0.0
        %1574 = vmatpush2.msra.mxu0 0.0
        %1575 = vmatprep.subr.mxu0 0.0
        %1576 = vmatpush2.msra.mxu0 0.0
        %1577 = vmatprep.subr.mxu0 0.0
        %1578 = vmatpush2.msra.mxu0 0.0
        %1579 = vmatprep.subr.mxu0 0.0
        %1580 = vmatpush2.msra.mxu0 0.0
        %1581 = vmatprep.subr.mxu0 0.0
        %1582 = vmatpush2.msra.mxu0 0.0
        %1583 = vmatprep.subr.mxu0 0.0
        %1584 = vmatpush2.msra.mxu0 0.0
        %1585 = vmatprep.subr.mxu0 0.0
        %1586 = vmatpush2.msra.mxu0 0.0
        %1587 = vmatprep.subr.mxu0 0.0
        %1588 = vmatpush2.msra.mxu0 0.0
        %1589 = vmatprep.subr.mxu0 0.0
        %1590 = vmatpush2.msra.mxu0 0.0
        %1591 = vmatprep.mubr.f32.mxu0 0.0
        %1592 = vmatmul.mubr.f32.gmra.mxu0 %v1522
        %v1593 = vpop.f32.mrf.mxu0
        %v1594 = vadd.f32 %v1517, %v1593
        %v1595 = vpop.f32.mrf.mxu0
        %1596 = vdwg.mxu0
        %v1597 = vadd.f32 %v1594, 1.0
        %1598 = vst.msk [vmem:[%s240] sm:$0xff] %vm341, %v1597
        %p1599 = scmp.lt.s32.totalorder %s20, 1
        %s1600 = scalar_select %p1599, %s20, 1
        %s1601 = smul.addr %s1600, 8
        %s1602 = scalar_lea.vmem %s3, %s1601
        // Predicated region
        $region45: #{tpu_custom_call.1} parent=31 // pred_check
          %p1603 = pneg %p111
        $region46: #{tpu_custom_call.1} parent=31 // pred_check_branch
          %1605 = sbr.rel (%p1603) target = $region48
        $region47: #{tpu_custom_call.1} parent=31 // pred_region
          _
        $region48: #{tpu_custom_call.1} parent=31 // pred_fallthru
          _
      $region32: #{tpu_custom_call.1} parent=5 // pred_fallthru
        _
      %p1606 = scmp.le.s32.totalorder 2, %s15
      // Predicated region
      $region49: #{tpu_custom_call.1} parent=5 // pred_check
        %p1607 = pneg %p1606
      $region50: #{tpu_custom_call.1} parent=5 // pred_check_branch
        %1609 = sbr.rel (%p1607) target = $region52
      $region51: #{tpu_custom_call.1} parent=5 // pred_region
        %s1610 = ssub.s32 %s15, 2
        // Predicated region
        $region53: #{tpu_custom_call.1} parent=51 // pred_check
          %p1611 = pneg %p117
        $region54: #{tpu_custom_call.1} parent=51 // pred_check_branch
          %1613 = sbr.rel (%p1611) target = $region56
        $region55: #{tpu_custom_call.1} parent=51 // pred_region
          %p1614 = scmp.lt.s32.totalorder %s21, 1
          %s1615 = scalar_select %p1614, %s21, 1
          %s1616 = smul.addr %s1615, 8
          %s1617 = scalar_lea.vmem %s3, %s1616
        $region56: #{tpu_custom_call.1} parent=51 // pred_fallthru
          _
      $region52: #{tpu_custom_call.1} parent=5 // pred_fallthru
        _
    $region6: #{tpu_custom_call.1} parent=1 // loop_footer
      %s19 = sadd.s32 1, %s15
    $region7: #{tpu_custom_call.1} parent=1 // loop_footer_branch
      %14 = sbr.rel target = $region3
    $region8: #{tpu_custom_call.1} parent=1 // loop_exit
      _
    %1618 = vsyncpa [#allocation3], 1
    %s1619 = scalar_lea.sflag [#allocation3], 1
    %1620 = vsyncpa %s1619, 1
    %1621 = vsyncpa [#allocation5], 1
    %s1622 = scalar_lea.sflag [#allocation5], 1
    %1623 = vsyncpa %s1622, 1

</llo_original>
